<compile_context>
chip_gen: v6e
topology: v6e:2x2x1
jax: 0.10.0
libtpu: 0.0.40
codegen_flags: <defaults>
</compile_context>

<pallas_src>
import numpy as np
import jax
import jax.numpy as jnp
from jax.experimental import pallas as pl
from jax.experimental.pallas import tpu as pltpu


# ----------------------------------------------------------------------------
# Pallas kernel
# ----------------------------------------------------------------------------
def make_deeponet_kernel(branch_layout, trunk_layout, modes, c_out):
    """branch_layout / trunk_layout: static tuples of (row_off, out_dim, in_dim)
    into the packed weight/bias operands."""

    def mlp(x, layout, w_ref, b_ref):
        # x: [in_dim, TP] (channel-major).  h = W^T @ x + b, ReLU between layers.
        h = x
        n = len(layout)
        for i, (roff, out_d, in_d) in enumerate(layout):
            w = w_ref[roff:roff + out_d, 0:in_d]          # [out, in]  (static slice)
            bb = b_ref[roff:roff + out_d, 0:1]            # [out, 1]
            h = jnp.dot(w, h, preferred_element_type=jnp.float32) + bb
            if i < n - 1:
                h = jnp.maximum(h, 0.0)
        return h

    def kernel(x1_ref, x2_ref, w_ref, b_ref, b0_ref, o_ref):
        # branch: [modes*c_out, TP]   trunk: [modes, TP]
        h = mlp(x1_ref[...].astype(jnp.float32), branch_layout, w_ref, b_ref)
        t = mlp(x2_ref[...].astype(jnp.float32), trunk_layout, w_ref, b_ref)

        # einsum 'bpmc,bpm->bpc' in channel-major layout, via VPU FMAs:
        #   out[c, p] = sum_m h[m*c_out + c, p] * t[m, p]
        out = h[0:c_out, :] * t[0:1, :]
        for m in range(1, modes):
            out = out + h[m * c_out:(m + 1) * c_out, :] * t[m:m + 1, :]

        o_ref[...] = (out + b0_ref[0]).astype(o_ref.dtype)

    return kernel


# ----------------------------------------------------------------------------
# Parameter packing (channel-major, 8-row aligned blocks)
# ----------------------------------------------------------------------------
def pack_params(branch_params, trunk_params):
    """Pack all (W[in,out], b[out]) layers into one transposed weight slab
    [R_total, max_in] and one bias column [R_total, 1]; return static layouts."""
    all_layers = list(branch_params) + list(trunk_params)
    max_in = max(int(w.shape[0]) for (w, _) in all_layers)

    w_blocks, b_blocks, layout = [], [], []
    roff = 0
    for (w, b) in all_layers:
        in_d, out_d = int(w.shape[0]), int(w.shape[1])
        pad_rows = (-out_d) % 8                       # keep row offsets 8-aligned
        wt = jnp.pad(jnp.transpose(w), ((0, pad_rows), (0, max_in - in_d)))
        bcol = jnp.pad(b.reshape(out_d, 1), ((0, pad_rows), (0, 0)))
        w_blocks.append(wt)
        b_blocks.append(bcol)
        layout.append((roff, out_d, in_d))
        roff += out_d + pad_rows

    wpack = jnp.concatenate(w_blocks, axis=0)          # [R_total, max_in]
    bpack = jnp.concatenate(b_blocks, axis=0)          # [R_total, 1]
    nb = len(branch_params)
    return wpack, bpack, tuple(layout[:nb]), tuple(layout[nb:])


# ----------------------------------------------------------------------------
# Wrapper
# ----------------------------------------------------------------------------
def _choose_point_tile(P, max_tp):
    assert P % 128 == 0, "num_points (D*H*W) must be a multiple of 128"
    tp = min(max_tp, P)
    tp -= tp % 128
    while P % tp:
        tp -= 128
    return tp


def deeponet3d_forward(x1, x2, params, *, modes, output_channels, max_tp=4096):
    """x1: [B, C_func, D, H, W], x2: [B, C_loc, D, H, W] -> [B, C_out, D, H, W]."""
    B, Cf, D, H, W = x1.shape
    Cl = x2.shape[1]
    P = D * H * W
    tp = _choose_point_tile(P, max_tp)

    # NCDHW is already channel-major: collapse spatial dims, no transpose.
    x1f = x1.reshape(B, Cf, P)
    x2f = x2.reshape(B, Cl, P)

    wpack, bpack, branch_layout, trunk_layout = pack_params(
        params["branch"], params["trunk"])
    b0 = params["b"]                                   # shape (1,), float32

    kernel = make_deeponet_kernel(branch_layout, trunk_layout,
                                  modes, output_channels)

    grid = (B, P // tp)
    out_flat = pl.pallas_call(
        kernel,
        out_shape=jax.ShapeDtypeStruct((B, output_channels, P), jnp.float32),
        grid=grid,
        in_specs=[
            pl.BlockSpec((None, Cf, tp), lambda b, p: (b, 0, p)),
            pl.BlockSpec((None, Cl, tp), lambda b, p: (b, 0, p)),
            pl.BlockSpec(wpack.shape, lambda b, p: (0, 0)),
            pl.BlockSpec(bpack.shape, lambda b, p: (0, 0)),
            pl.BlockSpec(memory_space=pltpu.SMEM),     # scalar bias b
        ],
        out_specs=pl.BlockSpec((None, output_channels, tp),
                               lambda b, p: (b, 0, p)),
        compiler_params=pltpu.CompilerParams(
            dimension_semantics=("parallel", "parallel"),
            vmem_limit_bytes=32 * 1024 * 1024),
    )(x1f, x2f, wpack, bpack, b0)

    # 'b c (d h w) -> b c d h w'  (pure reshape, no transpose)
    return out_flat.reshape(B, output_channels, D, H, W)


# ----------------------------------------------------------------------------
# Pure-JAX reference (mirrors the PyTorch module exactly)
# ----------------------------------------------------------------------------
def _ref_mlp(x, layer_params):
    n = len(layer_params)
    for i, (w, bb) in enumerate(layer_params):
        x = x @ w + bb
        if i < n - 1:
            x = jnp.maximum(x, 0.0)
    return x


def deeponet3d_reference(x1, x2, params, *, modes, output_channels):
    B, Cf, D, H, W = x1.shape
    P = D * H * W
    x1f = jnp.transpose(x1, (0, 2, 3, 4, 1)).reshape(B, P, Cf)
    x2f = jnp.transpose(x2, (0, 2, 3, 4, 1)).reshape(B, P, -1)
    ob = _ref_mlp(x1f, params["branch"]).reshape(B, P, modes, output_channels)
    ot = _ref_mlp(x2f, params["trunk"])
    sol = jnp.einsum("bpmc,bpm->bpc", ob, ot) + params["b"][0]
    return jnp.transpose(sol.reshape(B, D, H, W, output_channels), (0, 4, 1, 2, 3))


# ----------------------------------------------------------------------------
# Deterministic parameter construction (synthetic, not a checkpoint load)
# ----------------------------------------------------------------------------
def init_params(key, branch_dims, trunk_dims):
    def init_mlp(key, dims):
        layers = []
        for i in range(len(dims) - 1):
            key, kw, kb = jax.random.split(key, 3)
            bound = 1.0 / np.sqrt(dims[i])
            w = jax.random.uniform(kw, (dims[i], dims[i + 1]), jnp.float32,
                                   minval=-bound, maxval=bound)
            b = jax.random.uniform(kb, (dims[i + 1],), jnp.float32,
                                   minval=-bound, maxval=bound)
            layers.append((w, b))
        return key, layers

    key, branch = init_mlp(key, branch_dims)
    key, trunk = init_mlp(key, trunk_dims)
    return {"branch": branch, "trunk": trunk,
            "b": jnp.zeros((1,), jnp.float32)}   # self.b = torch.tensor(0.0)


# ----------------------------------------------------------------------------
if __name__ == "__main__":
    # Module hyperparameters (small but faithful to the reference forward).
    input_channels_func = 3     # (Re, SDF, Mask)
    input_channels_loc = 3      # (x, y, z)
    output_channels = 2
    modes = 8
    branch_net_layers = [32, 32]
    trunk_net_layers = [32, 32]

    branch_dims = [input_channels_func] + branch_net_layers + [modes * output_channels]
    trunk_dims = [input_channels_loc] + trunk_net_layers + [modes]

    B, D, H, W = 2, 8, 8, 8     # num_points = 512

    key = jax.random.PRNGKey(0)
    key, k1, k2, kp = jax.random.split(key, 4)
    x1 = jax.random.normal(k1, (B, input_channels_func, D, H, W), jnp.float32)
    x2 = jax.random.normal(k2, (B, input_channels_loc, D, H, W), jnp.float32)
    params = init_params(kp, branch_dims, trunk_dims)

    out = deeponet3d_forward(x1, x2, params, modes=modes,
                             output_channels=output_channels, max_tp=4096)
    out = jax.block_until_ready(out)

    ref = deeponet3d_reference(x1, x2, params, modes=modes,
                               output_channels=output_channels)
    ref = jax.block_until_ready(ref)

    assert out.shape == (B, output_channels, D, H, W), out.shape
    assert jnp.allclose(out, ref, atol=1e-4, rtol=1e-4), \
        float(jnp.max(jnp.abs(out - ref)))

    print("KERNEL_OK")
</pallas_src>

<mosaic_0001>
module attributes {stable_mosaic.version = 11 : i64} {
  func.func @kernel(%arg0: i32, %arg1: i32, %arg2: memref<1x3x512xf32, #tpu.memory_space<vmem>>, %arg3: memref<1x3x512xf32, #tpu.memory_space<vmem>>, %arg4: memref<152x32xf32, #tpu.memory_space<vmem>>, %arg5: memref<152x1xf32, #tpu.memory_space<vmem>>, %arg6: memref<1xf32, #tpu.memory_space<smem>>, %arg7: memref<1x2x512xf32, #tpu.memory_space<vmem>>) attributes {dimension_semantics = [#tpu.dimension_semantics<parallel>, #tpu.dimension_semantics<parallel>], iteration_bounds = array<i64: 2, 1>, scalar_prefetch = 0 : i64, scratch_operands = 0 : i64, tpu.core_type = #tpu.core_type<tc>, window_params = [{transform_indices = @transform_0, window_bounds = array<i64: 1, 3, 512>}, {transform_indices = @transform_1, window_bounds = array<i64: 1, 3, 512>}, {pipeline_mode = #tpu.pipeline_mode<synchronous>, transform_indices = @transform_2, window_bounds = array<i64: 152, 32>}, {pipeline_mode = #tpu.pipeline_mode<synchronous>, transform_indices = @transform_3, window_bounds = array<i64: 152, 1>}, {transform_indices = @transform_4, window_bounds = array<i64: 1>}, {transform_indices = @transform_5, window_bounds = array<i64: 1, 2, 512>}]} {
    %c0 = arith.constant 0 : index
    %c0_0 = arith.constant 0 : index
    %c0_1 = arith.constant 0 : index
    %0 = vector.load %arg2[%c0, %c0_0, %c0_1] : memref<1x3x512xf32, #tpu.memory_space<vmem>>, vector<1x3x512xf32>
    %1 = vector.shape_cast %0 : vector<1x3x512xf32> to vector<3x512xf32>
    %c0_2 = arith.constant 0 : index
    %c0_3 = arith.constant 0 : index
    %2 = vector.load %arg4[%c0_2, %c0_3] : memref<152x32xf32, #tpu.memory_space<vmem>>, vector<32x3xf32>
    %c0_4 = arith.constant 0 : index
    %c0_5 = arith.constant 0 : index
    %3 = vector.load %arg5[%c0_4, %c0_5] : memref<152x1xf32, #tpu.memory_space<vmem>>, vector<32x1xf32>
    %cst = arith.constant dense<0.000000e+00> : vector<32x512xf32>
    %4 = tpu.matmul %2, %1, %cst {dimension_numbers = #tpu.dot_dimension_numbers<[1], [0], [0], [1], [0, 0, 1, 1], [], []>} : vector<32x3xf32>, vector<3x512xf32>, vector<32x512xf32> -> vector<32x512xf32>
    %5 = vector.broadcast %3 : vector<32x1xf32> to vector<32x512xf32>
    %6 = arith.addf %4, %5 : vector<32x512xf32>
    %cst_6 = arith.constant 0.000000e+00 : f32
    %7 = vector.broadcast %cst_6 : f32 to vector<32x512xf32>
    %8 = arith.maximumf %6, %7 : vector<32x512xf32>
    %c32 = arith.constant 32 : index
    %c0_7 = arith.constant 0 : index
    %9 = vector.load %arg4[%c32, %c0_7] : memref<152x32xf32, #tpu.memory_space<vmem>>, vector<32x32xf32>
    %c32_8 = arith.constant 32 : index
    %c0_9 = arith.constant 0 : index
    %10 = vector.load %arg5[%c32_8, %c0_9] : memref<152x1xf32, #tpu.memory_space<vmem>>, vector<32x1xf32>
    %cst_10 = arith.constant dense<0.000000e+00> : vector<32x512xf32>
    %11 = tpu.matmul %9, %8, %cst_10 {dimension_numbers = #tpu.dot_dimension_numbers<[1], [0], [0], [1], [0, 0, 1, 1], [], []>} : vector<32x32xf32>, vector<32x512xf32>, vector<32x512xf32> -> vector<32x512xf32>
    %12 = vector.broadcast %10 : vector<32x1xf32> to vector<32x512xf32>
    %13 = arith.addf %11, %12 : vector<32x512xf32>
    %cst_11 = arith.constant 0.000000e+00 : f32
    %14 = vector.broadcast %cst_11 : f32 to vector<32x512xf32>
    %15 = arith.maximumf %13, %14 : vector<32x512xf32>
    %c64 = arith.constant 64 : index
    %c0_12 = arith.constant 0 : index
    %16 = vector.load %arg4[%c64, %c0_12] : memref<152x32xf32, #tpu.memory_space<vmem>>, vector<16x32xf32>
    %c64_13 = arith.constant 64 : index
    %c0_14 = arith.constant 0 : index
    %17 = vector.load %arg5[%c64_13, %c0_14] : memref<152x1xf32, #tpu.memory_space<vmem>>, vector<16x1xf32>
    %cst_15 = arith.constant dense<0.000000e+00> : vector<16x512xf32>
    %18 = tpu.matmul %16, %15, %cst_15 {dimension_numbers = #tpu.dot_dimension_numbers<[1], [0], [0], [1], [0, 0, 1, 1], [], []>} : vector<16x32xf32>, vector<32x512xf32>, vector<16x512xf32> -> vector<16x512xf32>
    %19 = vector.broadcast %17 : vector<16x1xf32> to vector<16x512xf32>
    %20 = arith.addf %18, %19 : vector<16x512xf32>
    %c0_16 = arith.constant 0 : index
    %c0_17 = arith.constant 0 : index
    %c0_18 = arith.constant 0 : index
    %21 = vector.load %arg3[%c0_16, %c0_17, %c0_18] : memref<1x3x512xf32, #tpu.memory_space<vmem>>, vector<1x3x512xf32>
    %22 = vector.shape_cast %21 : vector<1x3x512xf32> to vector<3x512xf32>
    %c80 = arith.constant 80 : index
    %c0_19 = arith.constant 0 : index
    %23 = vector.load %arg4[%c80, %c0_19] : memref<152x32xf32, #tpu.memory_space<vmem>>, vector<32x3xf32>
    %c80_20 = arith.constant 80 : index
    %c0_21 = arith.constant 0 : index
    %24 = vector.load %arg5[%c80_20, %c0_21] : memref<152x1xf32, #tpu.memory_space<vmem>>, vector<32x1xf32>
    %cst_22 = arith.constant dense<0.000000e+00> : vector<32x512xf32>
    %25 = tpu.matmul %23, %22, %cst_22 {dimension_numbers = #tpu.dot_dimension_numbers<[1], [0], [0], [1], [0, 0, 1, 1], [], []>} : vector<32x3xf32>, vector<3x512xf32>, vector<32x512xf32> -> vector<32x512xf32>
    %26 = vector.broadcast %24 : vector<32x1xf32> to vector<32x512xf32>
    %27 = arith.addf %25, %26 : vector<32x512xf32>
    %cst_23 = arith.constant 0.000000e+00 : f32
    %28 = vector.broadcast %cst_23 : f32 to vector<32x512xf32>
    %29 = arith.maximumf %27, %28 : vector<32x512xf32>
    %c112 = arith.constant 112 : index
    %c0_24 = arith.constant 0 : index
    %30 = vector.load %arg4[%c112, %c0_24] : memref<152x32xf32, #tpu.memory_space<vmem>>, vector<32x32xf32>
    %c112_25 = arith.constant 112 : index
    %c0_26 = arith.constant 0 : index
    %31 = vector.load %arg5[%c112_25, %c0_26] : memref<152x1xf32, #tpu.memory_space<vmem>>, vector<32x1xf32>
    %cst_27 = arith.constant dense<0.000000e+00> : vector<32x512xf32>
    %32 = tpu.matmul %30, %29, %cst_27 {dimension_numbers = #tpu.dot_dimension_numbers<[1], [0], [0], [1], [0, 0, 1, 1], [], []>} : vector<32x32xf32>, vector<32x512xf32>, vector<32x512xf32> -> vector<32x512xf32>
    %33 = vector.broadcast %31 : vector<32x1xf32> to vector<32x512xf32>
    %34 = arith.addf %32, %33 : vector<32x512xf32>
    %cst_28 = arith.constant 0.000000e+00 : f32
    %35 = vector.broadcast %cst_28 : f32 to vector<32x512xf32>
    %36 = arith.maximumf %34, %35 : vector<32x512xf32>
    %c144 = arith.constant 144 : index
    %c0_29 = arith.constant 0 : index
    %37 = vector.load %arg4[%c144, %c0_29] : memref<152x32xf32, #tpu.memory_space<vmem>>, vector<8x32xf32>
    %c144_30 = arith.constant 144 : index
    %c0_31 = arith.constant 0 : index
    %38 = vector.load %arg5[%c144_30, %c0_31] : memref<152x1xf32, #tpu.memory_space<vmem>>, vector<8x1xf32>
    %cst_32 = arith.constant dense<0.000000e+00> : vector<8x512xf32>
    %39 = tpu.matmul %37, %36, %cst_32 {dimension_numbers = #tpu.dot_dimension_numbers<[1], [0], [0], [1], [0, 0, 1, 1], [], []>} : vector<8x32xf32>, vector<32x512xf32>, vector<8x512xf32> -> vector<8x512xf32>
    %40 = vector.broadcast %38 : vector<8x1xf32> to vector<8x512xf32>
    %41 = arith.addf %39, %40 : vector<8x512xf32>
    %42 = vector.extract_strided_slice %20 {offsets = [0, 0], sizes = [2, 512], strides = [1, 1]} : vector<16x512xf32> to vector<2x512xf32>
    %43 = vector.extract_strided_slice %41 {offsets = [0, 0], sizes = [1, 512], strides = [1, 1]} : vector<8x512xf32> to vector<1x512xf32>
    %44 = vector.broadcast %43 : vector<1x512xf32> to vector<2x512xf32>
    %45 = arith.mulf %42, %44 : vector<2x512xf32>
    %46 = vector.extract_strided_slice %20 {offsets = [2, 0], sizes = [2, 512], strides = [1, 1]} : vector<16x512xf32> to vector<2x512xf32>
    %47 = vector.extract_strided_slice %41 {offsets = [1, 0], sizes = [1, 512], strides = [1, 1]} : vector<8x512xf32> to vector<1x512xf32>
    %48 = vector.broadcast %47 : vector<1x512xf32> to vector<2x512xf32>
    %49 = arith.mulf %46, %48 : vector<2x512xf32>
    %50 = arith.addf %45, %49 : vector<2x512xf32>
    %51 = vector.extract_strided_slice %20 {offsets = [4, 0], sizes = [2, 512], strides = [1, 1]} : vector<16x512xf32> to vector<2x512xf32>
    %52 = vector.extract_strided_slice %41 {offsets = [2, 0], sizes = [1, 512], strides = [1, 1]} : vector<8x512xf32> to vector<1x512xf32>
    %53 = vector.broadcast %52 : vector<1x512xf32> to vector<2x512xf32>
    %54 = arith.mulf %51, %53 : vector<2x512xf32>
    %55 = arith.addf %50, %54 : vector<2x512xf32>
    %56 = vector.extract_strided_slice %20 {offsets = [6, 0], sizes = [2, 512], strides = [1, 1]} : vector<16x512xf32> to vector<2x512xf32>
    %57 = vector.extract_strided_slice %41 {offsets = [3, 0], sizes = [1, 512], strides = [1, 1]} : vector<8x512xf32> to vector<1x512xf32>
    %58 = vector.broadcast %57 : vector<1x512xf32> to vector<2x512xf32>
    %59 = arith.mulf %56, %58 : vector<2x512xf32>
    %60 = arith.addf %55, %59 : vector<2x512xf32>
    %61 = vector.extract_strided_slice %20 {offsets = [8, 0], sizes = [2, 512], strides = [1, 1]} : vector<16x512xf32> to vector<2x512xf32>
    %62 = vector.extract_strided_slice %41 {offsets = [4, 0], sizes = [1, 512], strides = [1, 1]} : vector<8x512xf32> to vector<1x512xf32>
    %63 = vector.broadcast %62 : vector<1x512xf32> to vector<2x512xf32>
    %64 = arith.mulf %61, %63 : vector<2x512xf32>
    %65 = arith.addf %60, %64 : vector<2x512xf32>
    %66 = vector.extract_strided_slice %20 {offsets = [10, 0], sizes = [2, 512], strides = [1, 1]} : vector<16x512xf32> to vector<2x512xf32>
    %67 = vector.extract_strided_slice %41 {offsets = [5, 0], sizes = [1, 512], strides = [1, 1]} : vector<8x512xf32> to vector<1x512xf32>
    %68 = vector.broadcast %67 : vector<1x512xf32> to vector<2x512xf32>
    %69 = arith.mulf %66, %68 : vector<2x512xf32>
    %70 = arith.addf %65, %69 : vector<2x512xf32>
    %71 = vector.extract_strided_slice %20 {offsets = [12, 0], sizes = [2, 512], strides = [1, 1]} : vector<16x512xf32> to vector<2x512xf32>
    %72 = vector.extract_strided_slice %41 {offsets = [6, 0], sizes = [1, 512], strides = [1, 1]} : vector<8x512xf32> to vector<1x512xf32>
    %73 = vector.broadcast %72 : vector<1x512xf32> to vector<2x512xf32>
    %74 = arith.mulf %71, %73 : vector<2x512xf32>
    %75 = arith.addf %70, %74 : vector<2x512xf32>
    %76 = vector.extract_strided_slice %20 {offsets = [14, 0], sizes = [2, 512], strides = [1, 1]} : vector<16x512xf32> to vector<2x512xf32>
    %77 = vector.extract_strided_slice %41 {offsets = [7, 0], sizes = [1, 512], strides = [1, 1]} : vector<8x512xf32> to vector<1x512xf32>
    %78 = vector.broadcast %77 : vector<1x512xf32> to vector<2x512xf32>
    %79 = arith.mulf %76, %78 : vector<2x512xf32>
    %80 = arith.addf %75, %79 : vector<2x512xf32>
    %c0_33 = arith.constant 0 : index
    %81 = memref.load %arg6[%c0_33] : memref<1xf32, #tpu.memory_space<smem>>
    %82 = vector.broadcast %81 : f32 to vector<2x512xf32>
    %83 = arith.addf %80, %82 : vector<2x512xf32>
    %c0_34 = arith.constant 0 : index
    %c0_35 = arith.constant 0 : index
    %c0_36 = arith.constant 0 : index
    %84 = vector.load %arg7[%c0_34, %c0_35, %c0_36] : memref<1x2x512xf32, #tpu.memory_space<vmem>>, vector<1x2x512xf32>
    %85 = vector.shape_cast %84 : vector<1x2x512xf32> to vector<2x512xf32>
    %86 = vector.shape_cast %83 : vector<2x512xf32> to vector<1x2x512xf32>
    tpu.vector_store %arg7[%c0_34, %c0_35, %c0_36], %86 {strides = array<i32>} : memref<1x2x512xf32, #tpu.memory_space<vmem>>, vector<1x2x512xf32>,
    return
  }
  func.func @transform_0(%arg0: i32, %arg1: i32) -> (i32, i32, i32) {
    %c0_i32 = arith.constant 0 : i32
    %c0_i32_0 = arith.constant 0 : i32
    return %arg0, %c0_i32, %arg1 : i32, i32, i32
  }
  func.func @transform_1(%arg0: i32, %arg1: i32) -> (i32, i32, i32) {
    %c0_i32 = arith.constant 0 : i32
    %c0_i32_0 = arith.constant 0 : i32
    return %arg0, %c0_i32, %arg1 : i32, i32, i32
  }
  func.func @transform_2(%arg0: i32, %arg1: i32) -> (i32, i32) {
    %c0_i32 = arith.constant 0 : i32
    %c0_i32_0 = arith.constant 0 : i32
    %c0_i32_1 = arith.constant 0 : i32
    return %c0_i32, %c0_i32_0 : i32, i32
  }
  func.func @transform_3(%arg0: i32, %arg1: i32) -> (i32, i32) {
    %c0_i32 = arith.constant 0 : i32
    %c0_i32_0 = arith.constant 0 : i32
    %c0_i32_1 = arith.constant 0 : i32
    return %c0_i32, %c0_i32_0 : i32, i32
  }
  func.func @transform_4(%arg0: i32, %arg1: i32) -> i32 {
    %c0_i32 = arith.constant 0 : i32
    %c0_i32_0 = arith.constant 0 : i32
    return %c0_i32 : i32
  }
  func.func @transform_5(%arg0: i32, %arg1: i32) -> (i32, i32, i32) {
    %c0_i32 = arith.constant 0 : i32
    %c0_i32_0 = arith.constant 0 : i32
    return %arg0, %c0_i32, %arg1 : i32, i32, i32
  }
}

</mosaic_0001>

<llo_original>
// kernel: tpu_custom_call.1
$region0: #{tpu_custom_call.1}
  #allocation0 [shape = 'u32[]', space=smem, size = 0x4, offset = 0x4, fixed_abs, tag = 'smem constant byte address 0x4 - core index']
  #allocation1 [shape = 'u32[144,128]{1,0:T(1,128)}', space=vmem, size = 0x12000, scoped, tag = 'internal scratch']
  #allocation2 [shape = 'f32[1]{0:T(128)S(6)}', space=smem, size = 0x200, scoped, tag = 'scoped memory for tpu_custom_call.1']
  %s0 = inlined_call_operand.vmem [shape: f32[2,3,512], index: 0, kind: input, shape index: {}]
  %s1 = inlined_call_operand.vmem [shape: f32[2,3,512], index: 1, kind: input, shape index: {}]
  %s2 = inlined_call_operand.vmem [shape: f32[152,32], index: 2, kind: input, shape index: {}]
  %s3 = inlined_call_operand.vmem [shape: f32[152,1], index: 3, kind: input, shape index: {}]
  %s4 = inlined_call_operand.<no memory space> [shape: f32[1], index: 4, kind: input, shape index: {}]
  %s5 = inlined_call_operand.hbm [shape: f32[2,2,512], index: 5, kind: output, shape index: {}]
  %s6 = sld [smem:[#allocation0]]
  $region53: #{tpu_custom_call.1} parent=0
    _
  %s8 = ssub.s32 1, %s6
  %s9 = scalar_select 0, %s8, %s6
  %10 = sst [smem:[#allocation2]] %s4
  $region1: #{tpu_custom_call.1} parent=0
    #allocation3 [shape = 'u8[8192]{0}', space=vmem, size = 0x2000, scoped, tag = 'output window, operand 0']
    #allocation4 [shape = 's32[2]{0}', space=sflag, size = 0x8, scoped, tag = 'scoped memory for tpu_custom_call.1']
    %11 = vsyncpa [#allocation4], 0
    %s12 = scalar_lea.sflag [#allocation4], 1
    %13 = vsyncpa %s12, 0
    loop: start=0, step=1, limit=4
    $region2: #{tpu_custom_call.1} parent=1 // loop_pre_header
      _
    $region3: #{tpu_custom_call.1} parent=1 // loop_header
      %s15 = sphi 0, %s19
      %p16 = scmp.ge.s32.totalorder %s15, 4
      %s22 = sphi 0, %s34
      %s23 = sphi 0, %s30
      %s24 = sphi 0, %s22
      %s25 = sphi 0, %s23
      %s26 = sphi 0, %s24
      %s27 = sphi 0, %s25
      %s39 = sphi 0, %s41
      %s42 = sphi 0, %s39
      %s43 = sphi 0, %s42
      %s59 = sphi 0, %s43
      %s67 = sphi 0, %s69
      %s70 = sphi 0, %s67
      %s71 = sphi 0, %s70
      %s87 = sphi 0, %s71
      %s91 = sphi 0, %s91
      %s93 = sphi 0, %s91
      %s94 = sphi 0, %s93
      %s108 = sphi 0, %s94
      %s112 = sphi 0, %s112
      %s114 = sphi 0, %s112
      %s115 = sphi 0, %s114
      %s129 = sphi 0, %s115
      %s133 = sphi 0, %s133
      %s135 = sphi 0, %s133
      %s136 = sphi 0, %s135
      %s150 = sphi 0, %s136
      %s158 = sphi 0, %s160
      %s161 = sphi 0, %s158
      %s162 = sphi 0, %s161
      %s178 = sphi 0, %s162
    $region4: #{tpu_custom_call.1} parent=1 // loop_header_branch
      %18 = sbr.rel (%p16) target = $region8
    $region5: #{tpu_custom_call.1} parent=1 // loop_body
      %s20 = ssub.s32 %s15, 1
      %s21 = ssub.s32 %s15, 2
      %s28 = sadd.s32 1, %s23
      %p29 = scmp.ge.s32.totalorder %s28, 1
      %s30 = scalar_select %p29, 0, %s28
      %s31 = sadd.s32 1, %s22
      %s32 = scalar_select %p29, %s31, %s22
      %p33 = scmp.ge.s32.totalorder %s32, 2
      %s34 = scalar_select %p33, 0, %s32
      %s35 = ssub.s32 %s22, %s34
      %s36 = ssub.s32 %s23, %s30
      %s37 = sor.u32 %s35, %s36
      %p38 = scmp.eq.s32.totalorder %s37, 0
      %s40 = sadd.s32 %s39, 1
      %s41 = scalar_select %p38, %s39, %s40
      %p44 = pneg %p38
      %p45 = scmp.eq.s32.totalorder %s15, 1
      %p46 = por %p44, %p45
      %p47 = scmp.ne.s32.totalorder %s39, %s42
      %p48 = scmp.eq.s32.totalorder %s15, 0
      %p49 = por %p47, %p48
      %p50 = scmp.ne.s32.totalorder %s39, %s42
      %p51 = scmp.eq.s32.totalorder %s20, 1
      %p52 = por %p50, %p51
      %p53 = scmp.ne.s32.totalorder %s42, %s43
      %p54 = scmp.eq.s32.totalorder %s20, 0
      %p55 = por %p53, %p54
      %p56 = scmp.ne.s32.totalorder %s42, %s43
      %p57 = scmp.eq.s32.totalorder %s21, 1
      %p58 = por %p56, %p57
      %p60 = scmp.ne.s32.totalorder %s43, %s59
      %p61 = scmp.eq.s32.totalorder %s21, 0
      %p62 = por %p60, %p61
      %s63 = ssub.s32 %s22, %s34
      %s64 = ssub.s32 %s23, %s30
      %s65 = sor.u32 %s63, %s64
      %p66 = scmp.eq.s32.totalorder %s65, 0
      %s68 = sadd.s32 %s67, 1
      %s69 = scalar_select %p66, %s67, %s68
      %p72 = pneg %p66
      %p73 = scmp.eq.s32.totalorder %s15, 1
      %p74 = por %p72, %p73
      %p75 = scmp.ne.s32.totalorder %s67, %s70
      %p76 = scmp.eq.s32.totalorder %s15, 0
      %p77 = por %p75, %p76
      %p78 = scmp.ne.s32.totalorder %s67, %s70
      %p79 = scmp.eq.s32.totalorder %s20, 1
      %p80 = por %p78, %p79
      %p81 = scmp.ne.s32.totalorder %s70, %s71
      %p82 = scmp.eq.s32.totalorder %s20, 0
      %p83 = por %p81, %p82
      %p84 = scmp.ne.s32.totalorder %s70, %s71
      %p85 = scmp.eq.s32.totalorder %s21, 1
      %p86 = por %p84, %p85
      %p88 = scmp.ne.s32.totalorder %s71, %s87
      %p89 = scmp.eq.s32.totalorder %s21, 0
      %p90 = por %p88, %p89
      %s92 = sadd.s32 %s91, 1
      %p95 = scmp.eq.s32.totalorder %s15, 1
      %p96 = scmp.ne.s32.totalorder %s91, %s93
      %p97 = scmp.eq.s32.totalorder %s15, 0
      %p98 = por %p96, %p97
      %p99 = scmp.ne.s32.totalorder %s91, %s93
      %p100 = scmp.eq.s32.totalorder %s20, 1
      %p101 = por %p99, %p100
      %p102 = scmp.ne.s32.totalorder %s93, %s94
      %p103 = scmp.eq.s32.totalorder %s20, 0
      %p104 = por %p102, %p103
      %p105 = scmp.ne.s32.totalorder %s93, %s94
      %p106 = scmp.eq.s32.totalorder %s21, 1
      %p107 = por %p105, %p106
      %p109 = scmp.ne.s32.totalorder %s94, %s108
      %p110 = scmp.eq.s32.totalorder %s21, 0
      %p111 = por %p109, %p110
      %s113 = sadd.s32 %s112, 1
      %p116 = scmp.eq.s32.totalorder %s15, 1
      %p117 = scmp.ne.s32.totalorder %s112, %s114
      %p118 = scmp.eq.s32.totalorder %s15, 0
      %p119 = por %p117, %p118
      %p120 = scmp.ne.s32.totalorder %s112, %s114
      %p121 = scmp.eq.s32.totalorder %s20, 1
      %p122 = por %p120, %p121
      %p123 = scmp.ne.s32.totalorder %s114, %s115
      %p124 = scmp.eq.s32.totalorder %s20, 0
      %p125 = por %p123, %p124
      %p126 = scmp.ne.s32.totalorder %s114, %s115
      %p127 = scmp.eq.s32.totalorder %s21, 1
      %p128 = por %p126, %p127
      %p130 = scmp.ne.s32.totalorder %s115, %s129
      %p131 = scmp.eq.s32.totalorder %s21, 0
      %p132 = por %p130, %p131
      %s134 = sadd.s32 %s133, 1
      %p137 = scmp.eq.s32.totalorder %s15, 1
      %p138 = scmp.ne.s32.totalorder %s133, %s135
      %p139 = scmp.eq.s32.totalorder %s15, 0
      %p140 = por %p138, %p139
      %p141 = scmp.ne.s32.totalorder %s133, %s135
      %p142 = scmp.eq.s32.totalorder %s20, 1
      %p143 = por %p141, %p142
      %p144 = scmp.ne.s32.totalorder %s135, %s136
      %p145 = scmp.eq.s32.totalorder %s20, 0
      %p146 = por %p144, %p145
      %p147 = scmp.ne.s32.totalorder %s135, %s136
      %p148 = scmp.eq.s32.totalorder %s21, 1
      %p149 = por %p147, %p148
      %p151 = scmp.ne.s32.totalorder %s136, %s150
      %p152 = scmp.eq.s32.totalorder %s21, 0
      %p153 = por %p151, %p152
      %s154 = ssub.s32 %s22, %s34
      %s155 = ssub.s32 %s23, %s30
      %s156 = sor.u32 %s154, %s155
      %p157 = scmp.eq.s32.totalorder %s156, 0
      %s159 = sadd.s32 %s158, 1
      %s160 = scalar_select %p157, %s158, %s159
      %p163 = pneg %p157
      %p164 = scmp.eq.s32.totalorder %s15, 1
      %p165 = por %p163, %p164
      %p166 = scmp.ne.s32.totalorder %s158, %s161
      %p167 = scmp.eq.s32.totalorder %s15, 0
      %p168 = por %p166, %p167
      %p169 = scmp.ne.s32.totalorder %s158, %s161
      %p170 = scmp.eq.s32.totalorder %s20, 1
      %p171 = por %p169, %p170
      %p172 = scmp.ne.s32.totalorder %s161, %s162
      %p173 = scmp.eq.s32.totalorder %s20, 0
      %p174 = por %p172, %p173
      %p175 = scmp.ne.s32.totalorder %s161, %s162
      %p176 = scmp.eq.s32.totalorder %s21, 1
      %p177 = por %p175, %p176
      %p179 = scmp.ne.s32.totalorder %s162, %s178
      %p180 = scmp.eq.s32.totalorder %s21, 0
      %p181 = por %p179, %p180
      %p182 = scmp.le.s32.totalorder 1, %s15
      %p183 = scmp.lt.s32.totalorder %s15, 3
      %p184 = pnand %p182, %p183
      %p185 = pneg %p184
      // Predicated region
      $region9: #{tpu_custom_call.1} parent=5 // pred_check
        _
      $region10: #{tpu_custom_call.1} parent=5 // pred_check_branch
        %187 = sbr.rel (%p184) target = $region12
      $region11: #{tpu_custom_call.1} parent=5 // pred_region
        %s188 = ssub.s32 %s15, 1
        // Predicated region
        $region13: #{tpu_custom_call.1} parent=11 // pred_check
          %p189 = pneg %p104
        $region14: #{tpu_custom_call.1} parent=11 // pred_check_branch
          %191 = sbr.rel (%p189) target = $region16
        $region15: #{tpu_custom_call.1} parent=11 // pred_region
          _
        $region16: #{tpu_custom_call.1} parent=11 // pred_fallthru
          _
        // Predicated region
        $region17: #{tpu_custom_call.1} parent=11 // pred_check
          %p192 = pneg %p125
        $region18: #{tpu_custom_call.1} parent=11 // pred_check_branch
          %194 = sbr.rel (%p192) target = $region20
        $region19: #{tpu_custom_call.1} parent=11 // pred_region
          _
        $region20: #{tpu_custom_call.1} parent=11 // pred_fallthru
          _
        // Predicated region
        $region21: #{tpu_custom_call.1} parent=11 // pred_check
          %p195 = pneg %p146
        $region22: #{tpu_custom_call.1} parent=11 // pred_check_branch
          %197 = sbr.rel (%p195) target = $region24
        $region23: #{tpu_custom_call.1} parent=11 // pred_region
          _
        $region24: #{tpu_custom_call.1} parent=11 // pred_fallthru
          _
      $region12: #{tpu_custom_call.1} parent=5 // pred_fallthru
        _
      %p198 = scmp.lt.s32.totalorder %s15, 2
      // Predicated region
      $region25: #{tpu_custom_call.1} parent=5 // pred_check
        %p199 = pneg %p198
      $region26: #{tpu_custom_call.1} parent=5 // pred_check_branch
        %201 = sbr.rel (%p199) target = $region28
      $region27: #{tpu_custom_call.1} parent=5 // pred_region
        // Predicated region
        $region29: #{tpu_custom_call.1} parent=27 // pred_check
          %p202 = pneg %p49
        $region30: #{tpu_custom_call.1} parent=27 // pred_check_branch
          %204 = sbr.rel (%p202) target = $region32
        $region31: #{tpu_custom_call.1} parent=27 // pred_region
          %s205 = smul.u32 4, %s23
          %p206 = scmp.lt.s32.totalorder %s22, 1
          %s207 = scalar_select %p206, %s22, 1
          %p208 = scmp.lt.s32.totalorder %s205, 3
          %s209 = scalar_select %p208, %s205, 3
          %s210 = smul.addr %s207, 4
          %s211 = sadd.s32 %s209, %s210
          %s212 = smul.addr %s211, 4
          %s213 = scalar_lea.vmem %s0, %s212
          %s214 = smul.u32 4, %s23
        $region32: #{tpu_custom_call.1} parent=27 // pred_fallthru
          _
        // Predicated region
        $region33: #{tpu_custom_call.1} parent=27 // pred_check
          %p215 = pneg %p77
        $region34: #{tpu_custom_call.1} parent=27 // pred_check_branch
          %217 = sbr.rel (%p215) target = $region36
        $region35: #{tpu_custom_call.1} parent=27 // pred_region
          %s218 = smul.u32 4, %s23
          %p219 = scmp.lt.s32.totalorder %s22, 1
          %s220 = scalar_select %p219, %s22, 1
          %p221 = scmp.lt.s32.totalorder %s218, 3
          %s222 = scalar_select %p221, %s218, 3
          %s223 = smul.addr %s220, 4
          %s224 = sadd.s32 %s222, %s223
          %s225 = smul.addr %s224, 4
          %s226 = scalar_lea.vmem %s1, %s225
          %s227 = smul.u32 4, %s23
        $region36: #{tpu_custom_call.1} parent=27 // pred_fallthru
          _
      $region28: #{tpu_custom_call.1} parent=5 // pred_fallthru
        _
      %p228 = scmp.le.s32.totalorder 1, %s15
      %p229 = scmp.lt.s32.totalorder %s15, 3
      %p230 = pnand %p228, %p229
      %p231 = pneg %p230
      // Predicated region
      $region37: #{tpu_custom_call.1} parent=5 // pred_check
        _
      $region38: #{tpu_custom_call.1} parent=5 // pred_check_branch
        %233 = sbr.rel (%p230) target = $region40
      $region39: #{tpu_custom_call.1} parent=5 // pred_region
        %s234 = ssub.s32 %s15, 1
        %s235 = smul.u32 4, %s25
        %p236 = scmp.lt.s32.totalorder %s24, 1
        %s237 = scalar_select %p236, %s24, 1
        %p238 = scmp.lt.s32.totalorder %s235, 3
        %s239 = scalar_select %p238, %s235, 3
        %s240 = smul.addr %s237, 4
        %s241 = sadd.s32 %s239, %s240
        %s242 = smul.addr %s241, 4
        %s243 = scalar_lea.vmem %s0, %s242
        %p244 = pneg %p55
        %p245 = pneg %p52
        %s246 = smul.u32 4, %s25
        %p247 = scmp.lt.s32.totalorder %s24, 1
        %s248 = scalar_select %p247, %s24, 1
        %p249 = scmp.lt.s32.totalorder %s246, 3
        %s250 = scalar_select %p249, %s246, 3
        %s251 = smul.addr %s248, 4
        %s252 = sadd.s32 %s250, %s251
        %s253 = smul.addr %s252, 4
        %s254 = scalar_lea.vmem %s1, %s253
        %p255 = pneg %p83
        %p256 = pneg %p80
        %p257 = pneg %p104
        %p258 = pneg %p101
        %p259 = pneg %p125
        %p260 = pneg %p122
        %p261 = pneg %p146
        %p262 = pneg %p143
        %p263 = pneg %p174
        %p264 = pneg %p171
        %s265 = sand.u32 %s161, 1
        %s266 = scalar_lea.sflag [#allocation4], %s265
        %s267 = sand.u32 %s161, 1
        %s268 = smul.addr %s267, 8
        %s269 = scalar_lea.vmem [#allocation3], %s268
        %s270 = smul.u32 4, %s25
        %p271 = scmp.lt.s32.totalorder %s24, 1
        %s272 = scalar_select %p271, %s24, 1
        %p273 = scmp.lt.s32.totalorder %s270, 3
        %s274 = scalar_select %p273, %s270, 3
        %s275 = smul.addr %s272, 4
        %s276 = sadd.s32 %s274, %s275
        %s277 = smul.addr %s276, 4
        %s278 = scalar_lea.vmem %s0, %s277
        %s279 = smul.u32 4, %s25
        %s280 = smul.u32 4, %s25
        %p281 = scmp.lt.s32.totalorder %s24, 1
        %s282 = scalar_select %p281, %s24, 1
        %p283 = scmp.lt.s32.totalorder %s280, 3
        %s284 = scalar_select %p283, %s280, 3
        %s285 = smul.addr %s282, 4
        %s286 = sadd.s32 %s284, %s285
        %s287 = smul.addr %s286, 4
        %s288 = scalar_lea.vmem %s1, %s287
        %s289 = smul.u32 4, %s25
        %s290 = smul.u32 4, %s25
        %v291 = vld [vmem:[%s278] sm:$0x77]
        %v292 = vld [vmem:[%s278 + $0x8] sm:$0x77]
        %v293 = vld [vmem:[%s2] sm:$0xff]
        %v294 = vld [vmem:[%s2 + $0x8] sm:$0xff]
        %v295 = vld [vmem:[%s2 + $0x10] sm:$0xff]
        %v296 = vld [vmem:[%s2 + $0x18] sm:$0xff]
        %v297 = vld [vmem:[%s3] sm:$0xff]
        %v298 = vld [vmem:[%s3 + $0x8] sm:$0xff]
        %v299 = vld [vmem:[%s3 + $0x10] sm:$0xff]
        %v300 = vld [vmem:[%s3 + $0x18] sm:$0xff]
        %302 = vset.pattern.permute.xlu0 0
        %303 = vperm.xlu0 %302, %v297
        %v304 = vpop.permute.xlu0 %303
        %307 = vset.pattern.permute.xlu0 0
        %308 = vperm.xlu0 %307, %v298
        %v309 = vpop.permute.xlu0 %308
        %312 = vset.pattern.permute.xlu0 0
        %313 = vperm.xlu0 %312, %v299
        %v314 = vpop.permute.xlu0 %313
        %317 = vset.pattern.permute.xlu0 0
        %318 = vperm.xlu0 %317, %v300
        %v319 = vpop.permute.xlu0 %318
        %v323 = vcombine.high %v291, %v291
        %v324 = vcombine.high %v292, %v292
        %vm325 = vcmask 23552
        %v327 = vsel %vm325, %v293, 0
        %v330 = vsel %vm325, %v294, 0
        %v333 = vsel %vm325, %v295, 0
        %v336 = vsel %vm325, %v296, 0
        %vm338 = vcmask 1042432
        %v339 = vsel %vm338, %v291, 0
        %v341 = vsel %vm338, %v323, 0
        %v343 = vsel %vm338, %v292, 0
        %v345 = vsel %vm338, %v324, 0
        %347 = vmatprep.subr.mxu0 0.0
        %348 = vmatpush1.msra.mxu0 0.0
        %349 = vmatprep.subr.mxu0 0.0
        %350 = vmatpush1.msra.mxu0 0.0
        %351 = vmatprep.subr.mxu0 0.0
        %352 = vmatpush1.msra.mxu0 0.0
        %353 = vmatprep.subr.mxu0 0.0
        %354 = vmatpush1.msra.mxu0 0.0
        %355 = vmatprep.subr.mxu0 0.0
        %356 = vmatpush1.msra.mxu0 0.0
        %357 = vmatprep.subr.mxu0 0.0
        %358 = vmatpush1.msra.mxu0 0.0
        %359 = vmatprep.subr.mxu0 0.0
        %360 = vmatpush1.msra.mxu0 0.0
        %361 = vmatprep.subr.mxu0 0.0
        %362 = vmatpush1.msra.mxu0 0.0
        %363 = vmatprep.subr.mxu0 0.0
        %364 = vmatpush1.msra.mxu0 0.0
        %365 = vmatprep.subr.mxu0 0.0
        %366 = vmatpush1.msra.mxu0 0.0
        %367 = vmatprep.subr.mxu0 0.0
        %368 = vmatpush1.msra.mxu0 0.0
        %369 = vmatprep.subr.mxu0 0.0
        %370 = vmatpush1.msra.mxu0 0.0
        %371 = vmatprep.subr.mxu0 0.0
        %372 = vmatpush1.msra.mxu0 0.0
        %373 = vmatprep.subr.mxu0 0.0
        %374 = vmatpush1.msra.mxu0 0.0
        %375 = vmatprep.subr.mxu0 0.0
        %376 = vmatpush1.msra.mxu0 0.0
        %377 = vmatprep.subr.mxu0 %v341
        %378 = vmatpush1.msra.mxu0 %v339
        %379 = vmatprep.subr.mxu0 0.0
        %380 = vmatpush2.msra.mxu0 0.0
        %381 = vmatprep.subr.mxu0 0.0
        %382 = vmatpush2.msra.mxu0 0.0
        %383 = vmatprep.subr.mxu0 0.0
        %384 = vmatpush2.msra.mxu0 0.0
        %385 = vmatprep.subr.mxu0 0.0
        %386 = vmatpush2.msra.mxu0 0.0
        %387 = vmatprep.subr.mxu0 0.0
        %388 = vmatpush2.msra.mxu0 0.0
        %389 = vmatprep.subr.mxu0 0.0
        %390 = vmatpush2.msra.mxu0 0.0
        %391 = vmatprep.subr.mxu0 0.0
        %392 = vmatpush2.msra.mxu0 0.0
        %393 = vmatprep.subr.mxu0 0.0
        %394 = vmatpush2.msra.mxu0 0.0
        %395 = vmatprep.subr.mxu0 0.0
        %396 = vmatpush2.msra.mxu0 0.0
        %397 = vmatprep.subr.mxu0 0.0
        %398 = vmatpush2.msra.mxu0 0.0
        %399 = vmatprep.subr.mxu0 0.0
        %400 = vmatpush2.msra.mxu0 0.0
        %401 = vmatprep.subr.mxu0 0.0
        %402 = vmatpush2.msra.mxu0 0.0
        %403 = vmatprep.subr.mxu0 0.0
        %404 = vmatpush2.msra.mxu0 0.0
        %405 = vmatprep.subr.mxu0 0.0
        %406 = vmatpush2.msra.mxu0 0.0
        %407 = vmatprep.subr.mxu0 0.0
        %408 = vmatpush2.msra.mxu0 0.0
        %409 = vmatprep.subr.mxu0 0.0
        %410 = vmatpush2.msra.mxu0 0.0
        %411 = vmatprep.mubr.f32.mxu0 0.0
        %412 = vmatmul.mubr.f32.gmra.mxu0 %v327
        %v413 = vpop.f32.mrf.mxu0
        %v414 = vadd.f32 %v304, %v413
        %v415 = vpop.f32.mrf.mxu0
        %v416 = vadd.f32 %v304, %v415
        %417 = vmatprep.mubr.f32.mxu0 0.0
        %418 = vmatmul.mubr.f32.gmra.mxu0 %v330
        %v419 = vpop.f32.mrf.mxu0
        %v420 = vadd.f32 %v309, %v419
        %v421 = vpop.f32.mrf.mxu0
        %v422 = vadd.f32 %v309, %v421
        %423 = vmatprep.mubr.f32.mxu0 0.0
        %424 = vmatmul.mubr.f32.gmra.mxu0 %v333
        %v425 = vpop.f32.mrf.mxu0
        %v426 = vadd.f32 %v314, %v425
        %v427 = vpop.f32.mrf.mxu0
        %v428 = vadd.f32 %v314, %v427
        %429 = vmatprep.mubr.f32.mxu0 0.0
        %430 = vmatmul.mubr.f32.gmra.mxu0 %v336
        %v431 = vpop.f32.mrf.mxu0
        %v432 = vadd.f32 %v319, %v431
        %v433 = vpop.f32.mrf.mxu0
        %v434 = vadd.f32 %v319, %v433
        %435 = vdwg.mxu0
        %436 = vmatprep.subr.mxu0 0.0
        %437 = vmatpush1.msra.mxu0 0.0
        %438 = vmatprep.subr.mxu0 0.0
        %439 = vmatpush1.msra.mxu0 0.0
        %440 = vmatprep.subr.mxu0 0.0
        %441 = vmatpush1.msra.mxu0 0.0
        %442 = vmatprep.subr.mxu0 0.0
        %443 = vmatpush1.msra.mxu0 0.0
        %444 = vmatprep.subr.mxu0 0.0
        %445 = vmatpush1.msra.mxu0 0.0
        %446 = vmatprep.subr.mxu0 0.0
        %447 = vmatpush1.msra.mxu0 0.0
        %448 = vmatprep.subr.mxu0 0.0
        %449 = vmatpush1.msra.mxu0 0.0
        %450 = vmatprep.subr.mxu0 0.0
        %451 = vmatpush1.msra.mxu0 0.0
        %452 = vmatprep.subr.mxu0 0.0
        %453 = vmatpush1.msra.mxu0 0.0
        %454 = vmatprep.subr.mxu0 0.0
        %455 = vmatpush1.msra.mxu0 0.0
        %456 = vmatprep.subr.mxu0 0.0
        %457 = vmatpush1.msra.mxu0 0.0
        %458 = vmatprep.subr.mxu0 0.0
        %459 = vmatpush1.msra.mxu0 0.0
        %460 = vmatprep.subr.mxu0 0.0
        %461 = vmatpush1.msra.mxu0 0.0
        %462 = vmatprep.subr.mxu0 0.0
        %463 = vmatpush1.msra.mxu0 0.0
        %464 = vmatprep.subr.mxu0 0.0
        %465 = vmatpush1.msra.mxu0 0.0
        %466 = vmatprep.subr.mxu0 %v345
        %467 = vmatpush1.msra.mxu0 %v343
        %468 = vmatprep.subr.mxu0 0.0
        %469 = vmatpush2.msra.mxu0 0.0
        %470 = vmatprep.subr.mxu0 0.0
        %471 = vmatpush2.msra.mxu0 0.0
        %472 = vmatprep.subr.mxu0 0.0
        %473 = vmatpush2.msra.mxu0 0.0
        %474 = vmatprep.subr.mxu0 0.0
        %475 = vmatpush2.msra.mxu0 0.0
        %476 = vmatprep.subr.mxu0 0.0
        %477 = vmatpush2.msra.mxu0 0.0
        %478 = vmatprep.subr.mxu0 0.0
        %479 = vmatpush2.msra.mxu0 0.0
        %480 = vmatprep.subr.mxu0 0.0
        %481 = vmatpush2.msra.mxu0 0.0
        %482 = vmatprep.subr.mxu0 0.0
        %483 = vmatpush2.msra.mxu0 0.0
        %484 = vmatprep.subr.mxu0 0.0
        %485 = vmatpush2.msra.mxu0 0.0
        %486 = vmatprep.subr.mxu0 0.0
        %487 = vmatpush2.msra.mxu0 0.0
        %488 = vmatprep.subr.mxu0 0.0
        %489 = vmatpush2.msra.mxu0 0.0
        %490 = vmatprep.subr.mxu0 0.0
        %491 = vmatpush2.msra.mxu0 0.0
        %492 = vmatprep.subr.mxu0 0.0
        %493 = vmatpush2.msra.mxu0 0.0
        %494 = vmatprep.subr.mxu0 0.0
        %495 = vmatpush2.msra.mxu0 0.0
        %496 = vmatprep.subr.mxu0 0.0
        %497 = vmatpush2.msra.mxu0 0.0
        %498 = vmatprep.subr.mxu0 0.0
        %499 = vmatpush2.msra.mxu0 0.0
        %500 = vmatprep.mubr.f32.mxu0 0.0
        %501 = vmatmul.mubr.f32.gmra.mxu0 %v327
        %v502 = vpop.f32.mrf.mxu0
        %v503 = vadd.f32 %v304, %v502
        %v504 = vpop.f32.mrf.mxu0
        %v505 = vadd.f32 %v304, %v504
        %506 = vmatprep.mubr.f32.mxu0 0.0
        %507 = vmatmul.mubr.f32.gmra.mxu0 %v330
        %v508 = vpop.f32.mrf.mxu0
        %v509 = vadd.f32 %v309, %v508
        %v510 = vpop.f32.mrf.mxu0
        %v511 = vadd.f32 %v309, %v510
        %512 = vmatprep.mubr.f32.mxu0 0.0
        %513 = vmatmul.mubr.f32.gmra.mxu0 %v333
        %v514 = vpop.f32.mrf.mxu0
        %v515 = vadd.f32 %v314, %v514
        %v516 = vpop.f32.mrf.mxu0
        %v517 = vadd.f32 %v314, %v516
        %518 = vmatprep.mubr.f32.mxu0 0.0
        %519 = vmatmul.mubr.f32.gmra.mxu0 %v336
        %v520 = vpop.f32.mrf.mxu0
        %v521 = vadd.f32 %v319, %v520
        %v522 = vpop.f32.mrf.mxu0
        %v523 = vadd.f32 %v319, %v522
        %524 = vdwg.mxu0
        %v525 = vmax.f32 %v414, 0.0
        %v526 = vmax.f32 %v416, 0.0
        %v527 = vmax.f32 %v503, 0.0
        %v528 = vmax.f32 %v505, 0.0
        %v529 = vmax.f32 %v420, 0.0
        %v530 = vmax.f32 %v422, 0.0
        %v531 = vmax.f32 %v509, 0.0
        %v532 = vmax.f32 %v511, 0.0
        %v533 = vmax.f32 %v426, 0.0
        %v534 = vmax.f32 %v428, 0.0
        %v535 = vmax.f32 %v515, 0.0
        %v536 = vmax.f32 %v517, 0.0
        %v537 = vmax.f32 %v432, 0.0
        %v538 = vmax.f32 %v434, 0.0
        %v539 = vmax.f32 %v521, 0.0
        %v540 = vmax.f32 %v523, 0.0
        %v541 = vld [vmem:[%s2 + $0x20] sm:$0xff]
        %v542 = vld [vmem:[%s2 + $0x28] sm:$0xff]
        %v543 = vld [vmem:[%s2 + $0x30] sm:$0xff]
        %v544 = vld [vmem:[%s2 + $0x38] sm:$0xff]
        %v545 = vld [vmem:[%s3 + $0x20] sm:$0xff]
        %v546 = vld [vmem:[%s3 + $0x28] sm:$0xff]
        %v547 = vld [vmem:[%s3 + $0x30] sm:$0xff]
        %v548 = vld [vmem:[%s3 + $0x38] sm:$0xff]
        %550 = vset.pattern.permute.xlu0 0
        %551 = vperm.xlu0 %550, %v545
        %v552 = vpop.permute.xlu0 %551
        %555 = vset.pattern.permute.xlu0 0
        %556 = vperm.xlu0 %555, %v546
        %v557 = vpop.permute.xlu0 %556
        %560 = vset.pattern.permute.xlu0 0
        %561 = vperm.xlu0 %560, %v547
        %v562 = vpop.permute.xlu0 %561
        %565 = vset.pattern.permute.xlu0 0
        %566 = vperm.xlu0 %565, %v548
        %v567 = vpop.permute.xlu0 %566
        %vm569 = vcmask 261120
        %v571 = vsel %vm569, %v541, 0
        %v574 = vsel %vm569, %v542, 0
        %v577 = vsel %vm569, %v543, 0
        %v580 = vsel %vm569, %v544, 0
        %582 = vmatprep.subr.mxu0 0.0
        %583 = vmatpush1.msra.mxu0 0.0
        %584 = vmatprep.subr.mxu0 0.0
        %585 = vmatpush1.msra.mxu0 0.0
        %586 = vmatprep.subr.mxu0 0.0
        %587 = vmatpush1.msra.mxu0 0.0
        %588 = vmatprep.subr.mxu0 0.0
        %589 = vmatpush1.msra.mxu0 0.0
        %590 = vmatprep.subr.mxu0 0.0
        %591 = vmatpush1.msra.mxu0 0.0
        %592 = vmatprep.subr.mxu0 0.0
        %593 = vmatpush1.msra.mxu0 0.0
        %594 = vmatprep.subr.mxu0 0.0
        %595 = vmatpush1.msra.mxu0 0.0
        %596 = vmatprep.subr.mxu0 0.0
        %597 = vmatpush1.msra.mxu0 0.0
        %598 = vmatprep.subr.mxu0 0.0
        %599 = vmatpush1.msra.mxu0 0.0
        %600 = vmatprep.subr.mxu0 0.0
        %601 = vmatpush1.msra.mxu0 0.0
        %602 = vmatprep.subr.mxu0 0.0
        %603 = vmatpush1.msra.mxu0 0.0
        %604 = vmatprep.subr.mxu0 0.0
        %605 = vmatpush1.msra.mxu0 0.0
        %606 = vmatprep.subr.mxu0 %v538
        %607 = vmatpush1.msra.mxu0 %v537
        %608 = vmatprep.subr.mxu0 %v534
        %609 = vmatpush1.msra.mxu0 %v533
        %610 = vmatprep.subr.mxu0 %v530
        %611 = vmatpush1.msra.mxu0 %v529
        %612 = vmatprep.subr.mxu0 %v526
        %613 = vmatpush1.msra.mxu0 %v525
        %614 = vmatprep.subr.mxu0 0.0
        %615 = vmatpush2.msra.mxu0 0.0
        %616 = vmatprep.subr.mxu0 0.0
        %617 = vmatpush2.msra.mxu0 0.0
        %618 = vmatprep.subr.mxu0 0.0
        %619 = vmatpush2.msra.mxu0 0.0
        %620 = vmatprep.subr.mxu0 0.0
        %621 = vmatpush2.msra.mxu0 0.0
        %622 = vmatprep.subr.mxu0 0.0
        %623 = vmatpush2.msra.mxu0 0.0
        %624 = vmatprep.subr.mxu0 0.0
        %625 = vmatpush2.msra.mxu0 0.0
        %626 = vmatprep.subr.mxu0 0.0
        %627 = vmatpush2.msra.mxu0 0.0
        %628 = vmatprep.subr.mxu0 0.0
        %629 = vmatpush2.msra.mxu0 0.0
        %630 = vmatprep.subr.mxu0 0.0
        %631 = vmatpush2.msra.mxu0 0.0
        %632 = vmatprep.subr.mxu0 0.0
        %633 = vmatpush2.msra.mxu0 0.0
        %634 = vmatprep.subr.mxu0 0.0
        %635 = vmatpush2.msra.mxu0 0.0
        %636 = vmatprep.subr.mxu0 0.0
        %637 = vmatpush2.msra.mxu0 0.0
        %638 = vmatprep.subr.mxu0 0.0
        %639 = vmatpush2.msra.mxu0 0.0
        %640 = vmatprep.subr.mxu0 0.0
        %641 = vmatpush2.msra.mxu0 0.0
        %642 = vmatprep.subr.mxu0 0.0
        %643 = vmatpush2.msra.mxu0 0.0
        %644 = vmatprep.subr.mxu0 0.0
        %645 = vmatpush2.msra.mxu0 0.0
        %646 = vmatprep.mubr.f32.mxu0 0.0
        %647 = vmatmul.mubr.f32.gmra.mxu0 %v571
        %v648 = vpop.f32.mrf.mxu0
        %v649 = vadd.f32 %v552, %v648
        %v650 = vpop.f32.mrf.mxu0
        %v651 = vadd.f32 %v552, %v650
        %652 = vmatprep.mubr.f32.mxu0 0.0
        %653 = vmatmul.mubr.f32.gmra.mxu0 %v574
        %v654 = vpop.f32.mrf.mxu0
        %v655 = vadd.f32 %v557, %v654
        %v656 = vpop.f32.mrf.mxu0
        %v657 = vadd.f32 %v557, %v656
        %658 = vmatprep.mubr.f32.mxu0 0.0
        %659 = vmatmul.mubr.f32.gmra.mxu0 %v577
        %v660 = vpop.f32.mrf.mxu0
        %v661 = vadd.f32 %v562, %v660
        %v662 = vpop.f32.mrf.mxu0
        %v663 = vadd.f32 %v562, %v662
        %664 = vmatprep.mubr.f32.mxu0 0.0
        %665 = vmatmul.mubr.f32.gmra.mxu0 %v580
        %v666 = vpop.f32.mrf.mxu0
        %v667 = vadd.f32 %v567, %v666
        %v668 = vpop.f32.mrf.mxu0
        %v669 = vadd.f32 %v567, %v668
        %670 = vdwg.mxu0
        %671 = vmatprep.subr.mxu0 0.0
        %672 = vmatpush1.msra.mxu0 0.0
        %673 = vmatprep.subr.mxu0 0.0
        %674 = vmatpush1.msra.mxu0 0.0
        %675 = vmatprep.subr.mxu0 0.0
        %676 = vmatpush1.msra.mxu0 0.0
        %677 = vmatprep.subr.mxu0 0.0
        %678 = vmatpush1.msra.mxu0 0.0
        %679 = vmatprep.subr.mxu0 0.0
        %680 = vmatpush1.msra.mxu0 0.0
        %681 = vmatprep.subr.mxu0 0.0
        %682 = vmatpush1.msra.mxu0 0.0
        %683 = vmatprep.subr.mxu0 0.0
        %684 = vmatpush1.msra.mxu0 0.0
        %685 = vmatprep.subr.mxu0 0.0
        %686 = vmatpush1.msra.mxu0 0.0
        %687 = vmatprep.subr.mxu0 0.0
        %688 = vmatpush1.msra.mxu0 0.0
        %689 = vmatprep.subr.mxu0 0.0
        %690 = vmatpush1.msra.mxu0 0.0
        %691 = vmatprep.subr.mxu0 0.0
        %692 = vmatpush1.msra.mxu0 0.0
        %693 = vmatprep.subr.mxu0 0.0
        %694 = vmatpush1.msra.mxu0 0.0
        %695 = vmatprep.subr.mxu0 %v540
        %696 = vmatpush1.msra.mxu0 %v539
        %697 = vmatprep.subr.mxu0 %v536
        %698 = vmatpush1.msra.mxu0 %v535
        %699 = vmatprep.subr.mxu0 %v532
        %700 = vmatpush1.msra.mxu0 %v531
        %701 = vmatprep.subr.mxu0 %v528
        %702 = vmatpush1.msra.mxu0 %v527
        %703 = vmatprep.subr.mxu0 0.0
        %704 = vmatpush2.msra.mxu0 0.0
        %705 = vmatprep.subr.mxu0 0.0
        %706 = vmatpush2.msra.mxu0 0.0
        %707 = vmatprep.subr.mxu0 0.0
        %708 = vmatpush2.msra.mxu0 0.0
        %709 = vmatprep.subr.mxu0 0.0
        %710 = vmatpush2.msra.mxu0 0.0
        %711 = vmatprep.subr.mxu0 0.0
        %712 = vmatpush2.msra.mxu0 0.0
        %713 = vmatprep.subr.mxu0 0.0
        %714 = vmatpush2.msra.mxu0 0.0
        %715 = vmatprep.subr.mxu0 0.0
        %716 = vmatpush2.msra.mxu0 0.0
        %717 = vmatprep.subr.mxu0 0.0
        %718 = vmatpush2.msra.mxu0 0.0
        %719 = vmatprep.subr.mxu0 0.0
        %720 = vmatpush2.msra.mxu0 0.0
        %721 = vmatprep.subr.mxu0 0.0
        %722 = vmatpush2.msra.mxu0 0.0
        %723 = vmatprep.subr.mxu0 0.0
        %724 = vmatpush2.msra.mxu0 0.0
        %725 = vmatprep.subr.mxu0 0.0
        %726 = vmatpush2.msra.mxu0 0.0
        %727 = vmatprep.subr.mxu0 0.0
        %728 = vmatpush2.msra.mxu0 0.0
        %729 = vmatprep.subr.mxu0 0.0
        %730 = vmatpush2.msra.mxu0 0.0
        %731 = vmatprep.subr.mxu0 0.0
        %732 = vmatpush2.msra.mxu0 0.0
        %733 = vmatprep.subr.mxu0 0.0
        %734 = vmatpush2.msra.mxu0 0.0
        %735 = vmatprep.mubr.f32.mxu0 0.0
        %736 = vmatmul.mubr.f32.gmra.mxu0 %v571
        %v737 = vpop.f32.mrf.mxu0
        %v738 = vadd.f32 %v552, %v737
        %v739 = vpop.f32.mrf.mxu0
        %v740 = vadd.f32 %v552, %v739
        %741 = vmatprep.mubr.f32.mxu0 0.0
        %742 = vmatmul.mubr.f32.gmra.mxu0 %v574
        %v743 = vpop.f32.mrf.mxu0
        %v744 = vadd.f32 %v557, %v743
        %v745 = vpop.f32.mrf.mxu0
        %v746 = vadd.f32 %v557, %v745
        %747 = vmatprep.mubr.f32.mxu0 0.0
        %748 = vmatmul.mubr.f32.gmra.mxu0 %v577
        %v749 = vpop.f32.mrf.mxu0
        %v750 = vadd.f32 %v562, %v749
        %v751 = vpop.f32.mrf.mxu0
        %v752 = vadd.f32 %v562, %v751
        %753 = vmatprep.mubr.f32.mxu0 0.0
        %754 = vmatmul.mubr.f32.gmra.mxu0 %v580
        %v755 = vpop.f32.mrf.mxu0
        %v756 = vadd.f32 %v567, %v755
        %v757 = vpop.f32.mrf.mxu0
        %v758 = vadd.f32 %v567, %v757
        %759 = vdwg.mxu0
        %v760 = vmax.f32 %v649, 0.0
        %v761 = vmax.f32 %v651, 0.0
        %v762 = vmax.f32 %v738, 0.0
        %v763 = vmax.f32 %v740, 0.0
        %v764 = vmax.f32 %v655, 0.0
        %v765 = vmax.f32 %v657, 0.0
        %v766 = vmax.f32 %v744, 0.0
        %v767 = vmax.f32 %v746, 0.0
        %v768 = vmax.f32 %v661, 0.0
        %v769 = vmax.f32 %v663, 0.0
        %v770 = vmax.f32 %v750, 0.0
        %v771 = vmax.f32 %v752, 0.0
        %v772 = vmax.f32 %v667, 0.0
        %v773 = vmax.f32 %v669, 0.0
        %v774 = vmax.f32 %v756, 0.0
        %v775 = vmax.f32 %v758, 0.0
        %v776 = vld [vmem:[%s2 + $0x40] sm:$0xff]
        %v777 = vld [vmem:[%s2 + $0x48] sm:$0xff]
        %v778 = vld [vmem:[%s3 + $0x40] sm:$0xff]
        %v779 = vld [vmem:[%s3 + $0x48] sm:$0xff]
        %781 = vset.pattern.permute.xlu0 0
        %782 = vperm.xlu0 %781, %v778
        %v783 = vpop.permute.xlu0 %782
        %786 = vset.pattern.permute.xlu0 0
        %787 = vperm.xlu0 %786, %v779
        %v788 = vpop.permute.xlu0 %787
        %v791 = vsel %vm569, %v776, 0
        %v794 = vsel %vm569, %v777, 0
        %796 = vmatprep.subr.mxu0 0.0
        %797 = vmatpush1.msra.mxu0 0.0
        %798 = vmatprep.subr.mxu0 0.0
        %799 = vmatpush1.msra.mxu0 0.0
        %800 = vmatprep.subr.mxu0 0.0
        %801 = vmatpush1.msra.mxu0 0.0
        %802 = vmatprep.subr.mxu0 0.0
        %803 = vmatpush1.msra.mxu0 0.0
        %804 = vmatprep.subr.mxu0 0.0
        %805 = vmatpush1.msra.mxu0 0.0
        %806 = vmatprep.subr.mxu0 0.0
        %807 = vmatpush1.msra.mxu0 0.0
        %808 = vmatprep.subr.mxu0 0.0
        %809 = vmatpush1.msra.mxu0 0.0
        %810 = vmatprep.subr.mxu0 0.0
        %811 = vmatpush1.msra.mxu0 0.0
        %812 = vmatprep.subr.mxu0 0.0
        %813 = vmatpush1.msra.mxu0 0.0
        %814 = vmatprep.subr.mxu0 0.0
        %815 = vmatpush1.msra.mxu0 0.0
        %816 = vmatprep.subr.mxu0 0.0
        %817 = vmatpush1.msra.mxu0 0.0
        %818 = vmatprep.subr.mxu0 0.0
        %819 = vmatpush1.msra.mxu0 0.0
        %820 = vmatprep.subr.mxu0 %v773
        %821 = vmatpush1.msra.mxu0 %v772
        %822 = vmatprep.subr.mxu0 %v769
        %823 = vmatpush1.msra.mxu0 %v768
        %824 = vmatprep.subr.mxu0 %v765
        %825 = vmatpush1.msra.mxu0 %v764
        %826 = vmatprep.subr.mxu0 %v761
        %827 = vmatpush1.msra.mxu0 %v760
        %828 = vmatprep.subr.mxu0 0.0
        %829 = vmatpush2.msra.mxu0 0.0
        %830 = vmatprep.subr.mxu0 0.0
        %831 = vmatpush2.msra.mxu0 0.0
        %832 = vmatprep.subr.mxu0 0.0
        %833 = vmatpush2.msra.mxu0 0.0
        %834 = vmatprep.subr.mxu0 0.0
        %835 = vmatpush2.msra.mxu0 0.0
        %836 = vmatprep.subr.mxu0 0.0
        %837 = vmatpush2.msra.mxu0 0.0
        %838 = vmatprep.subr.mxu0 0.0
        %839 = vmatpush2.msra.mxu0 0.0
        %840 = vmatprep.subr.mxu0 0.0
        %841 = vmatpush2.msra.mxu0 0.0
        %842 = vmatprep.subr.mxu0 0.0
        %843 = vmatpush2.msra.mxu0 0.0
        %844 = vmatprep.subr.mxu0 0.0
        %845 = vmatpush2.msra.mxu0 0.0
        %846 = vmatprep.subr.mxu0 0.0
        %847 = vmatpush2.msra.mxu0 0.0
        %848 = vmatprep.subr.mxu0 0.0
        %849 = vmatpush2.msra.mxu0 0.0
        %850 = vmatprep.subr.mxu0 0.0
        %851 = vmatpush2.msra.mxu0 0.0
        %852 = vmatprep.subr.mxu0 0.0
        %853 = vmatpush2.msra.mxu0 0.0
        %854 = vmatprep.subr.mxu0 0.0
        %855 = vmatpush2.msra.mxu0 0.0
        %856 = vmatprep.subr.mxu0 0.0
        %857 = vmatpush2.msra.mxu0 0.0
        %858 = vmatprep.subr.mxu0 0.0
        %859 = vmatpush2.msra.mxu0 0.0
        %860 = vmatprep.mubr.f32.mxu0 0.0
        %861 = vmatmul.mubr.f32.gmra.mxu0 %v791
        %v862 = vpop.f32.mrf.mxu0
        %v863 = vadd.f32 %v783, %v862
        %v864 = vpop.f32.mrf.mxu0
        %v865 = vadd.f32 %v783, %v864
        %866 = vmatprep.mubr.f32.mxu0 0.0
        %867 = vmatmul.mubr.f32.gmra.mxu0 %v794
        %v868 = vpop.f32.mrf.mxu0
        %v869 = vadd.f32 %v788, %v868
        %v870 = vpop.f32.mrf.mxu0
        %v871 = vadd.f32 %v788, %v870
        %872 = vdwg.mxu0
        %873 = vmatprep.subr.mxu0 0.0
        %874 = vmatpush1.msra.mxu0 0.0
        %875 = vmatprep.subr.mxu0 0.0
        %876 = vmatpush1.msra.mxu0 0.0
        %877 = vmatprep.subr.mxu0 0.0
        %878 = vmatpush1.msra.mxu0 0.0
        %879 = vmatprep.subr.mxu0 0.0
        %880 = vmatpush1.msra.mxu0 0.0
        %881 = vmatprep.subr.mxu0 0.0
        %882 = vmatpush1.msra.mxu0 0.0
        %883 = vmatprep.subr.mxu0 0.0
        %884 = vmatpush1.msra.mxu0 0.0
        %885 = vmatprep.subr.mxu0 0.0
        %886 = vmatpush1.msra.mxu0 0.0
        %887 = vmatprep.subr.mxu0 0.0
        %888 = vmatpush1.msra.mxu0 0.0
        %889 = vmatprep.subr.mxu0 0.0
        %890 = vmatpush1.msra.mxu0 0.0
        %891 = vmatprep.subr.mxu0 0.0
        %892 = vmatpush1.msra.mxu0 0.0
        %893 = vmatprep.subr.mxu0 0.0
        %894 = vmatpush1.msra.mxu0 0.0
        %895 = vmatprep.subr.mxu0 0.0
        %896 = vmatpush1.msra.mxu0 0.0
        %897 = vmatprep.subr.mxu0 %v775
        %898 = vmatpush1.msra.mxu0 %v774
        %899 = vmatprep.subr.mxu0 %v771
        %900 = vmatpush1.msra.mxu0 %v770
        %901 = vmatprep.subr.mxu0 %v767
        %902 = vmatpush1.msra.mxu0 %v766
        %903 = vmatprep.subr.mxu0 %v763
        %904 = vmatpush1.msra.mxu0 %v762
        %905 = vmatprep.subr.mxu0 0.0
        %906 = vmatpush2.msra.mxu0 0.0
        %907 = vmatprep.subr.mxu0 0.0
        %908 = vmatpush2.msra.mxu0 0.0
        %909 = vmatprep.subr.mxu0 0.0
        %910 = vmatpush2.msra.mxu0 0.0
        %911 = vmatprep.subr.mxu0 0.0
        %912 = vmatpush2.msra.mxu0 0.0
        %913 = vmatprep.subr.mxu0 0.0
        %914 = vmatpush2.msra.mxu0 0.0
        %915 = vmatprep.subr.mxu0 0.0
        %916 = vmatpush2.msra.mxu0 0.0
        %917 = vmatprep.subr.mxu0 0.0
        %918 = vmatpush2.msra.mxu0 0.0
        %919 = vmatprep.subr.mxu0 0.0
        %920 = vmatpush2.msra.mxu0 0.0
        %921 = vmatprep.subr.mxu0 0.0
        %922 = vmatpush2.msra.mxu0 0.0
        %923 = vmatprep.subr.mxu0 0.0
        %924 = vmatpush2.msra.mxu0 0.0
        %925 = vmatprep.subr.mxu0 0.0
        %926 = vmatpush2.msra.mxu0 0.0
        %927 = vmatprep.subr.mxu0 0.0
        %928 = vmatpush2.msra.mxu0 0.0
        %929 = vmatprep.subr.mxu0 0.0
        %930 = vmatpush2.msra.mxu0 0.0
        %931 = vmatprep.subr.mxu0 0.0
        %932 = vmatpush2.msra.mxu0 0.0
        %933 = vmatprep.subr.mxu0 0.0
        %934 = vmatpush2.msra.mxu0 0.0
        %935 = vmatprep.subr.mxu0 0.0
        %936 = vmatpush2.msra.mxu0 0.0
        %937 = vmatprep.mubr.f32.mxu0 0.0
        %938 = vmatmul.mubr.f32.gmra.mxu0 %v791
        %v939 = vpop.f32.mrf.mxu0
        %v940 = vadd.f32 %v783, %v939
        %v941 = vpop.f32.mrf.mxu0
        %v942 = vadd.f32 %v783, %v941
        %943 = vmatprep.mubr.f32.mxu0 0.0
        %944 = vmatmul.mubr.f32.gmra.mxu0 %v794
        %v945 = vpop.f32.mrf.mxu0
        %v946 = vadd.f32 %v788, %v945
        %v947 = vpop.f32.mrf.mxu0
        %v948 = vadd.f32 %v788, %v947
        %949 = vdwg.mxu0
        %v950 = vld [vmem:[%s288] sm:$0x77]
        %v951 = vld [vmem:[%s288 + $0x8] sm:$0x77]
        %v952 = vld [vmem:[%s2 + $0x50] sm:$0xff]
        %v953 = vld [vmem:[%s2 + $0x58] sm:$0xff]
        %v954 = vld [vmem:[%s2 + $0x60] sm:$0xff]
        %v955 = vld [vmem:[%s2 + $0x68] sm:$0xff]
        %v956 = vld [vmem:[%s3 + $0x50] sm:$0xff]
        %v957 = vld [vmem:[%s3 + $0x58] sm:$0xff]
        %v958 = vld [vmem:[%s3 + $0x60] sm:$0xff]
        %v959 = vld [vmem:[%s3 + $0x68] sm:$0xff]
        %961 = vset.pattern.permute.xlu0 0
        %962 = vperm.xlu0 %961, %v956
        %v963 = vpop.permute.xlu0 %962
        %966 = vset.pattern.permute.xlu0 0
        %967 = vperm.xlu0 %966, %v957
        %v968 = vpop.permute.xlu0 %967
        %971 = vset.pattern.permute.xlu0 0
        %972 = vperm.xlu0 %971, %v958
        %v973 = vpop.permute.xlu0 %972
        %976 = vset.pattern.permute.xlu0 0
        %977 = vperm.xlu0 %976, %v959
        %v978 = vpop.permute.xlu0 %977
        %v982 = vcombine.high %v950, %v950
        %v983 = vcombine.high %v951, %v951
        %v985 = vsel %vm325, %v952, 0
        %v988 = vsel %vm325, %v953, 0
        %v991 = vsel %vm325, %v954, 0
        %v994 = vsel %vm325, %v955, 0
        %v996 = vsel %vm338, %v950, 0
        %v998 = vsel %vm338, %v982, 0
        %v1000 = vsel %vm338, %v951, 0
        %v1002 = vsel %vm338, %v983, 0
        %1004 = vmatprep.subr.mxu0 0.0
        %1005 = vmatpush1.msra.mxu0 0.0
        %1006 = vmatprep.subr.mxu0 0.0
        %1007 = vmatpush1.msra.mxu0 0.0
        %1008 = vmatprep.subr.mxu0 0.0
        %1009 = vmatpush1.msra.mxu0 0.0
        %1010 = vmatprep.subr.mxu0 0.0
        %1011 = vmatpush1.msra.mxu0 0.0
        %1012 = vmatprep.subr.mxu0 0.0
        %1013 = vmatpush1.msra.mxu0 0.0
        %1014 = vmatprep.subr.mxu0 0.0
        %1015 = vmatpush1.msra.mxu0 0.0
        %1016 = vmatprep.subr.mxu0 0.0
        %1017 = vmatpush1.msra.mxu0 0.0
        %1018 = vmatprep.subr.mxu0 0.0
        %1019 = vmatpush1.msra.mxu0 0.0
        %1020 = vmatprep.subr.mxu0 0.0
        %1021 = vmatpush1.msra.mxu0 0.0
        %1022 = vmatprep.subr.mxu0 0.0
        %1023 = vmatpush1.msra.mxu0 0.0
        %1024 = vmatprep.subr.mxu0 0.0
        %1025 = vmatpush1.msra.mxu0 0.0
        %1026 = vmatprep.subr.mxu0 0.0
        %1027 = vmatpush1.msra.mxu0 0.0
        %1028 = vmatprep.subr.mxu0 0.0
        %1029 = vmatpush1.msra.mxu0 0.0
        %1030 = vmatprep.subr.mxu0 0.0
        %1031 = vmatpush1.msra.mxu0 0.0
        %1032 = vmatprep.subr.mxu0 0.0
        %1033 = vmatpush1.msra.mxu0 0.0
        %1034 = vmatprep.subr.mxu0 %v998
        %1035 = vmatpush1.msra.mxu0 %v996
        %1036 = vmatprep.subr.mxu0 0.0
        %1037 = vmatpush2.msra.mxu0 0.0
        %1038 = vmatprep.subr.mxu0 0.0
        %1039 = vmatpush2.msra.mxu0 0.0
        %1040 = vmatprep.subr.mxu0 0.0
        %1041 = vmatpush2.msra.mxu0 0.0
        %1042 = vmatprep.subr.mxu0 0.0
        %1043 = vmatpush2.msra.mxu0 0.0
        %1044 = vmatprep.subr.mxu0 0.0
        %1045 = vmatpush2.msra.mxu0 0.0
        %1046 = vmatprep.subr.mxu0 0.0
        %1047 = vmatpush2.msra.mxu0 0.0
        %1048 = vmatprep.subr.mxu0 0.0
        %1049 = vmatpush2.msra.mxu0 0.0
        %1050 = vmatprep.subr.mxu0 0.0
        %1051 = vmatpush2.msra.mxu0 0.0
        %1052 = vmatprep.subr.mxu0 0.0
        %1053 = vmatpush2.msra.mxu0 0.0
        %1054 = vmatprep.subr.mxu0 0.0
        %1055 = vmatpush2.msra.mxu0 0.0
        %1056 = vmatprep.subr.mxu0 0.0
        %1057 = vmatpush2.msra.mxu0 0.0
        %1058 = vmatprep.subr.mxu0 0.0
        %1059 = vmatpush2.msra.mxu0 0.0
        %1060 = vmatprep.subr.mxu0 0.0
        %1061 = vmatpush2.msra.mxu0 0.0
        %1062 = vmatprep.subr.mxu0 0.0
        %1063 = vmatpush2.msra.mxu0 0.0
        %1064 = vmatprep.subr.mxu0 0.0
        %1065 = vmatpush2.msra.mxu0 0.0
        %1066 = vmatprep.subr.mxu0 0.0
        %1067 = vmatpush2.msra.mxu0 0.0
        %1068 = vmatprep.mubr.f32.mxu0 0.0
        %1069 = vmatmul.mubr.f32.gmra.mxu0 %v985
        %v1070 = vpop.f32.mrf.mxu0
        %v1071 = vadd.f32 %v963, %v1070
        %v1072 = vpop.f32.mrf.mxu0
        %v1073 = vadd.f32 %v963, %v1072
        %1074 = vmatprep.mubr.f32.mxu0 0.0
        %1075 = vmatmul.mubr.f32.gmra.mxu0 %v988
        %v1076 = vpop.f32.mrf.mxu0
        %v1077 = vadd.f32 %v968, %v1076
        %v1078 = vpop.f32.mrf.mxu0
        %v1079 = vadd.f32 %v968, %v1078
        %1080 = vmatprep.mubr.f32.mxu0 0.0
        %1081 = vmatmul.mubr.f32.gmra.mxu0 %v991
        %v1082 = vpop.f32.mrf.mxu0
        %v1083 = vadd.f32 %v973, %v1082
        %v1084 = vpop.f32.mrf.mxu0
        %v1085 = vadd.f32 %v973, %v1084
        %1086 = vmatprep.mubr.f32.mxu0 0.0
        %1087 = vmatmul.mubr.f32.gmra.mxu0 %v994
        %v1088 = vpop.f32.mrf.mxu0
        %v1089 = vadd.f32 %v978, %v1088
        %v1090 = vpop.f32.mrf.mxu0
        %v1091 = vadd.f32 %v978, %v1090
        %1092 = vdwg.mxu0
        %1093 = vmatprep.subr.mxu0 0.0
        %1094 = vmatpush1.msra.mxu0 0.0
        %1095 = vmatprep.subr.mxu0 0.0
        %1096 = vmatpush1.msra.mxu0 0.0
        %1097 = vmatprep.subr.mxu0 0.0
        %1098 = vmatpush1.msra.mxu0 0.0
        %1099 = vmatprep.subr.mxu0 0.0
        %1100 = vmatpush1.msra.mxu0 0.0
        %1101 = vmatprep.subr.mxu0 0.0
        %1102 = vmatpush1.msra.mxu0 0.0
        %1103 = vmatprep.subr.mxu0 0.0
        %1104 = vmatpush1.msra.mxu0 0.0
        %1105 = vmatprep.subr.mxu0 0.0
        %1106 = vmatpush1.msra.mxu0 0.0
        %1107 = vmatprep.subr.mxu0 0.0
        %1108 = vmatpush1.msra.mxu0 0.0
        %1109 = vmatprep.subr.mxu0 0.0
        %1110 = vmatpush1.msra.mxu0 0.0
        %1111 = vmatprep.subr.mxu0 0.0
        %1112 = vmatpush1.msra.mxu0 0.0
        %1113 = vmatprep.subr.mxu0 0.0
        %1114 = vmatpush1.msra.mxu0 0.0
        %1115 = vmatprep.subr.mxu0 0.0
        %1116 = vmatpush1.msra.mxu0 0.0
        %1117 = vmatprep.subr.mxu0 0.0
        %1118 = vmatpush1.msra.mxu0 0.0
        %1119 = vmatprep.subr.mxu0 0.0
        %1120 = vmatpush1.msra.mxu0 0.0
        %1121 = vmatprep.subr.mxu0 0.0
        %1122 = vmatpush1.msra.mxu0 0.0
        %1123 = vmatprep.subr.mxu0 %v1002
        %1124 = vmatpush1.msra.mxu0 %v1000
        %1125 = vmatprep.subr.mxu0 0.0
        %1126 = vmatpush2.msra.mxu0 0.0
        %1127 = vmatprep.subr.mxu0 0.0
        %1128 = vmatpush2.msra.mxu0 0.0
        %1129 = vmatprep.subr.mxu0 0.0
        %1130 = vmatpush2.msra.mxu0 0.0
        %1131 = vmatprep.subr.mxu0 0.0
        %1132 = vmatpush2.msra.mxu0 0.0
        %1133 = vmatprep.subr.mxu0 0.0
        %1134 = vmatpush2.msra.mxu0 0.0
        %1135 = vmatprep.subr.mxu0 0.0
        %1136 = vmatpush2.msra.mxu0 0.0
        %1137 = vmatprep.subr.mxu0 0.0
        %1138 = vmatpush2.msra.mxu0 0.0
        %1139 = vmatprep.subr.mxu0 0.0
        %1140 = vmatpush2.msra.mxu0 0.0
        %1141 = vmatprep.subr.mxu0 0.0
        %1142 = vmatpush2.msra.mxu0 0.0
        %1143 = vmatprep.subr.mxu0 0.0
        %1144 = vmatpush2.msra.mxu0 0.0
        %1145 = vmatprep.subr.mxu0 0.0
        %1146 = vmatpush2.msra.mxu0 0.0
        %1147 = vmatprep.subr.mxu0 0.0
        %1148 = vmatpush2.msra.mxu0 0.0
        %1149 = vmatprep.subr.mxu0 0.0
        %1150 = vmatpush2.msra.mxu0 0.0
        %1151 = vmatprep.subr.mxu0 0.0
        %1152 = vmatpush2.msra.mxu0 0.0
        %1153 = vmatprep.subr.mxu0 0.0
        %1154 = vmatpush2.msra.mxu0 0.0
        %1155 = vmatprep.subr.mxu0 0.0
        %1156 = vmatpush2.msra.mxu0 0.0
        %1157 = vmatprep.mubr.f32.mxu0 0.0
        %1158 = vmatmul.mubr.f32.gmra.mxu0 %v985
        %v1159 = vpop.f32.mrf.mxu0
        %v1160 = vadd.f32 %v963, %v1159
        %v1161 = vpop.f32.mrf.mxu0
        %v1162 = vadd.f32 %v963, %v1161
        %1163 = vmatprep.mubr.f32.mxu0 0.0
        %1164 = vmatmul.mubr.f32.gmra.mxu0 %v988
        %v1165 = vpop.f32.mrf.mxu0
        %v1166 = vadd.f32 %v968, %v1165
        %v1167 = vpop.f32.mrf.mxu0
        %v1168 = vadd.f32 %v968, %v1167
        %1169 = vmatprep.mubr.f32.mxu0 0.0
        %1170 = vmatmul.mubr.f32.gmra.mxu0 %v991
        %v1171 = vpop.f32.mrf.mxu0
        %v1172 = vadd.f32 %v973, %v1171
        %v1173 = vpop.f32.mrf.mxu0
        %v1174 = vadd.f32 %v973, %v1173
        %1175 = vmatprep.mubr.f32.mxu0 0.0
        %1176 = vmatmul.mubr.f32.gmra.mxu0 %v994
        %v1177 = vpop.f32.mrf.mxu0
        %v1178 = vadd.f32 %v978, %v1177
        %v1179 = vpop.f32.mrf.mxu0
        %v1180 = vadd.f32 %v978, %v1179
        %1181 = vdwg.mxu0
        %v1182 = vmax.f32 %v1071, 0.0
        %v1183 = vmax.f32 %v1073, 0.0
        %v1184 = vmax.f32 %v1160, 0.0
        %v1185 = vmax.f32 %v1162, 0.0
        %v1186 = vmax.f32 %v1077, 0.0
        %v1187 = vmax.f32 %v1079, 0.0
        %v1188 = vmax.f32 %v1166, 0.0
        %v1189 = vmax.f32 %v1168, 0.0
        %v1190 = vmax.f32 %v1083, 0.0
        %v1191 = vmax.f32 %v1085, 0.0
        %v1192 = vmax.f32 %v1172, 0.0
        %v1193 = vmax.f32 %v1174, 0.0
        %v1194 = vmax.f32 %v1089, 0.0
        %v1195 = vmax.f32 %v1091, 0.0
        %v1196 = vmax.f32 %v1178, 0.0
        %v1197 = vmax.f32 %v1180, 0.0
        %v1198 = vld [vmem:[%s2 + $0x70] sm:$0xff]
        %v1199 = vld [vmem:[%s2 + $0x78] sm:$0xff]
        %v1200 = vld [vmem:[%s2 + $0x80] sm:$0xff]
        %v1201 = vld [vmem:[%s2 + $0x88] sm:$0xff]
        %v1202 = vld [vmem:[%s3 + $0x70] sm:$0xff]
        %v1203 = vld [vmem:[%s3 + $0x78] sm:$0xff]
        %v1204 = vld [vmem:[%s3 + $0x80] sm:$0xff]
        %v1205 = vld [vmem:[%s3 + $0x88] sm:$0xff]
        %1207 = vset.pattern.permute.xlu0 0
        %1208 = vperm.xlu0 %1207, %v1202
        %v1209 = vpop.permute.xlu0 %1208
        %1212 = vset.pattern.permute.xlu0 0
        %1213 = vperm.xlu0 %1212, %v1203
        %v1214 = vpop.permute.xlu0 %1213
        %1217 = vset.pattern.permute.xlu0 0
        %1218 = vperm.xlu0 %1217, %v1204
        %v1219 = vpop.permute.xlu0 %1218
        %1222 = vset.pattern.permute.xlu0 0
        %1223 = vperm.xlu0 %1222, %v1205
        %v1224 = vpop.permute.xlu0 %1223
        %v1227 = vsel %vm569, %v1198, 0
        %v1230 = vsel %vm569, %v1199, 0
        %v1233 = vsel %vm569, %v1200, 0
        %v1236 = vsel %vm569, %v1201, 0
        %1238 = vmatprep.subr.mxu0 0.0
        %1239 = vmatpush1.msra.mxu0 0.0
        %1240 = vmatprep.subr.mxu0 0.0
        %1241 = vmatpush1.msra.mxu0 0.0
        %1242 = vmatprep.subr.mxu0 0.0
        %1243 = vmatpush1.msra.mxu0 0.0
        %1244 = vmatprep.subr.mxu0 0.0
        %1245 = vmatpush1.msra.mxu0 0.0
        %1246 = vmatprep.subr.mxu0 0.0
        %1247 = vmatpush1.msra.mxu0 0.0
        %1248 = vmatprep.subr.mxu0 0.0
        %1249 = vmatpush1.msra.mxu0 0.0
        %1250 = vmatprep.subr.mxu0 0.0
        %1251 = vmatpush1.msra.mxu0 0.0
        %1252 = vmatprep.subr.mxu0 0.0
        %1253 = vmatpush1.msra.mxu0 0.0
        %1254 = vmatprep.subr.mxu0 0.0
        %1255 = vmatpush1.msra.mxu0 0.0
        %1256 = vmatprep.subr.mxu0 0.0
        %1257 = vmatpush1.msra.mxu0 0.0
        %1258 = vmatprep.subr.mxu0 0.0
        %1259 = vmatpush1.msra.mxu0 0.0
        %1260 = vmatprep.subr.mxu0 0.0
        %1261 = vmatpush1.msra.mxu0 0.0
        %1262 = vmatprep.subr.mxu0 %v1195
        %1263 = vmatpush1.msra.mxu0 %v1194
        %1264 = vmatprep.subr.mxu0 %v1191
        %1265 = vmatpush1.msra.mxu0 %v1190
        %1266 = vmatprep.subr.mxu0 %v1187
        %1267 = vmatpush1.msra.mxu0 %v1186
        %1268 = vmatprep.subr.mxu0 %v1183
        %1269 = vmatpush1.msra.mxu0 %v1182
        %1270 = vmatprep.subr.mxu0 0.0
        %1271 = vmatpush2.msra.mxu0 0.0
        %1272 = vmatprep.subr.mxu0 0.0
        %1273 = vmatpush2.msra.mxu0 0.0
        %1274 = vmatprep.subr.mxu0 0.0
        %1275 = vmatpush2.msra.mxu0 0.0
        %1276 = vmatprep.subr.mxu0 0.0
        %1277 = vmatpush2.msra.mxu0 0.0
        %1278 = vmatprep.subr.mxu0 0.0
        %1279 = vmatpush2.msra.mxu0 0.0
        %1280 = vmatprep.subr.mxu0 0.0
        %1281 = vmatpush2.msra.mxu0 0.0
        %1282 = vmatprep.subr.mxu0 0.0
        %1283 = vmatpush2.msra.mxu0 0.0
        %1284 = vmatprep.subr.mxu0 0.0
        %1285 = vmatpush2.msra.mxu0 0.0
        %1286 = vmatprep.subr.mxu0 0.0
        %1287 = vmatpush2.msra.mxu0 0.0
        %1288 = vmatprep.subr.mxu0 0.0
        %1289 = vmatpush2.msra.mxu0 0.0
        %1290 = vmatprep.subr.mxu0 0.0
        %1291 = vmatpush2.msra.mxu0 0.0
        %1292 = vmatprep.subr.mxu0 0.0
        %1293 = vmatpush2.msra.mxu0 0.0
        %1294 = vmatprep.subr.mxu0 0.0
        %1295 = vmatpush2.msra.mxu0 0.0
        %1296 = vmatprep.subr.mxu0 0.0
        %1297 = vmatpush2.msra.mxu0 0.0
        %1298 = vmatprep.subr.mxu0 0.0
        %1299 = vmatpush2.msra.mxu0 0.0
        %1300 = vmatprep.subr.mxu0 0.0
        %1301 = vmatpush2.msra.mxu0 0.0
        %1302 = vmatprep.mubr.f32.mxu0 0.0
        %1303 = vmatmul.mubr.f32.gmra.mxu0 %v1227
        %v1304 = vpop.f32.mrf.mxu0
        %v1305 = vadd.f32 %v1209, %v1304
        %v1306 = vpop.f32.mrf.mxu0
        %v1307 = vadd.f32 %v1209, %v1306
        %1308 = vmatprep.mubr.f32.mxu0 0.0
        %1309 = vmatmul.mubr.f32.gmra.mxu0 %v1230
        %v1310 = vpop.f32.mrf.mxu0
        %v1311 = vadd.f32 %v1214, %v1310
        %v1312 = vpop.f32.mrf.mxu0
        %v1313 = vadd.f32 %v1214, %v1312
        %1314 = vmatprep.mubr.f32.mxu0 0.0
        %1315 = vmatmul.mubr.f32.gmra.mxu0 %v1233
        %v1316 = vpop.f32.mrf.mxu0
        %v1317 = vadd.f32 %v1219, %v1316
        %v1318 = vpop.f32.mrf.mxu0
        %v1319 = vadd.f32 %v1219, %v1318
        %1320 = vmatprep.mubr.f32.mxu0 0.0
        %1321 = vmatmul.mubr.f32.gmra.mxu0 %v1236
        %v1322 = vpop.f32.mrf.mxu0
        %v1323 = vadd.f32 %v1224, %v1322
        %v1324 = vpop.f32.mrf.mxu0
        %v1325 = vadd.f32 %v1224, %v1324
        %1326 = vdwg.mxu0
        %1327 = vmatprep.subr.mxu0 0.0
        %1328 = vmatpush1.msra.mxu0 0.0
        %1329 = vmatprep.subr.mxu0 0.0
        %1330 = vmatpush1.msra.mxu0 0.0
        %1331 = vmatprep.subr.mxu0 0.0
        %1332 = vmatpush1.msra.mxu0 0.0
        %1333 = vmatprep.subr.mxu0 0.0
        %1334 = vmatpush1.msra.mxu0 0.0
        %1335 = vmatprep.subr.mxu0 0.0
        %1336 = vmatpush1.msra.mxu0 0.0
        %1337 = vmatprep.subr.mxu0 0.0
        %1338 = vmatpush1.msra.mxu0 0.0
        %1339 = vmatprep.subr.mxu0 0.0
        %1340 = vmatpush1.msra.mxu0 0.0
        %1341 = vmatprep.subr.mxu0 0.0
        %1342 = vmatpush1.msra.mxu0 0.0
        %1343 = vmatprep.subr.mxu0 0.0
        %1344 = vmatpush1.msra.mxu0 0.0
        %1345 = vmatprep.subr.mxu0 0.0
        %1346 = vmatpush1.msra.mxu0 0.0
        %1347 = vmatprep.subr.mxu0 0.0
        %1348 = vmatpush1.msra.mxu0 0.0
        %1349 = vmatprep.subr.mxu0 0.0
        %1350 = vmatpush1.msra.mxu0 0.0
        %1351 = vmatprep.subr.mxu0 %v1197
        %1352 = vmatpush1.msra.mxu0 %v1196
        %1353 = vmatprep.subr.mxu0 %v1193
        %1354 = vmatpush1.msra.mxu0 %v1192
        %1355 = vmatprep.subr.mxu0 %v1189
        %1356 = vmatpush1.msra.mxu0 %v1188
        %1357 = vmatprep.subr.mxu0 %v1185
        %1358 = vmatpush1.msra.mxu0 %v1184
        %1359 = vmatprep.subr.mxu0 0.0
        %1360 = vmatpush2.msra.mxu0 0.0
        %1361 = vmatprep.subr.mxu0 0.0
        %1362 = vmatpush2.msra.mxu0 0.0
        %1363 = vmatprep.subr.mxu0 0.0
        %1364 = vmatpush2.msra.mxu0 0.0
        %1365 = vmatprep.subr.mxu0 0.0
        %1366 = vmatpush2.msra.mxu0 0.0
        %1367 = vmatprep.subr.mxu0 0.0
        %1368 = vmatpush2.msra.mxu0 0.0
        %1369 = vmatprep.subr.mxu0 0.0
        %1370 = vmatpush2.msra.mxu0 0.0
        %1371 = vmatprep.subr.mxu0 0.0
        %1372 = vmatpush2.msra.mxu0 0.0
        %1373 = vmatprep.subr.mxu0 0.0
        %1374 = vmatpush2.msra.mxu0 0.0
        %1375 = vmatprep.subr.mxu0 0.0
        %1376 = vmatpush2.msra.mxu0 0.0
        %1377 = vmatprep.subr.mxu0 0.0
        %1378 = vmatpush2.msra.mxu0 0.0
        %1379 = vmatprep.subr.mxu0 0.0
        %1380 = vmatpush2.msra.mxu0 0.0
        %1381 = vmatprep.subr.mxu0 0.0
        %1382 = vmatpush2.msra.mxu0 0.0
        %1383 = vmatprep.subr.mxu0 0.0
        %1384 = vmatpush2.msra.mxu0 0.0
        %1385 = vmatprep.subr.mxu0 0.0
        %1386 = vmatpush2.msra.mxu0 0.0
        %1387 = vmatprep.subr.mxu0 0.0
        %1388 = vmatpush2.msra.mxu0 0.0
        %1389 = vmatprep.subr.mxu0 0.0
        %1390 = vmatpush2.msra.mxu0 0.0
        %1391 = vmatprep.mubr.f32.mxu0 0.0
        %1392 = vmatmul.mubr.f32.gmra.mxu0 %v1227
        %v1393 = vpop.f32.mrf.mxu0
        %v1394 = vadd.f32 %v1209, %v1393
        %v1395 = vpop.f32.mrf.mxu0
        %v1396 = vadd.f32 %v1209, %v1395
        %1397 = vmatprep.mubr.f32.mxu0 0.0
        %1398 = vmatmul.mubr.f32.gmra.mxu0 %v1230
        %v1399 = vpop.f32.mrf.mxu0
        %v1400 = vadd.f32 %v1214, %v1399
        %v1401 = vpop.f32.mrf.mxu0
        %v1402 = vadd.f32 %v1214, %v1401
        %1403 = vmatprep.mubr.f32.mxu0 0.0
        %1404 = vmatmul.mubr.f32.gmra.mxu0 %v1233
        %v1405 = vpop.f32.mrf.mxu0
        %v1406 = vadd.f32 %v1219, %v1405
        %v1407 = vpop.f32.mrf.mxu0
        %v1408 = vadd.f32 %v1219, %v1407
        %1409 = vmatprep.mubr.f32.mxu0 0.0
        %1410 = vmatmul.mubr.f32.gmra.mxu0 %v1236
        %v1411 = vpop.f32.mrf.mxu0
        %v1412 = vadd.f32 %v1224, %v1411
        %v1413 = vpop.f32.mrf.mxu0
        %v1414 = vadd.f32 %v1224, %v1413
        %1415 = vdwg.mxu0
        %v1416 = vmax.f32 %v1305, 0.0
        %v1417 = vmax.f32 %v1307, 0.0
        %v1418 = vmax.f32 %v1394, 0.0
        %v1419 = vmax.f32 %v1396, 0.0
        %v1420 = vmax.f32 %v1311, 0.0
        %v1421 = vmax.f32 %v1313, 0.0
        %v1422 = vmax.f32 %v1400, 0.0
        %v1423 = vmax.f32 %v1402, 0.0
        %v1424 = vmax.f32 %v1317, 0.0
        %v1425 = vmax.f32 %v1319, 0.0
        %v1426 = vmax.f32 %v1406, 0.0
        %v1427 = vmax.f32 %v1408, 0.0
        %v1428 = vmax.f32 %v1323, 0.0
        %v1429 = vmax.f32 %v1325, 0.0
        %v1430 = vmax.f32 %v1412, 0.0
        %v1431 = vmax.f32 %v1414, 0.0
        %v1432 = vld [vmem:[%s2 + $0x90] sm:$0xff]
        %v1433 = vld [vmem:[%s3 + $0x90] sm:$0xff]
        %1435 = vset.pattern.permute.xlu0 0
        %1436 = vperm.xlu0 %1435, %v1433
        %v1437 = vpop.permute.xlu0 %1436
        %v1440 = vsel %vm569, %v1432, 0
        %1442 = vmatprep.subr.mxu0 0.0
        %1443 = vmatpush1.msra.mxu0 0.0
        %1444 = vmatprep.subr.mxu0 0.0
        %1445 = vmatpush1.msra.mxu0 0.0
        %1446 = vmatprep.subr.mxu0 0.0
        %1447 = vmatpush1.msra.mxu0 0.0
        %1448 = vmatprep.subr.mxu0 0.0
        %1449 = vmatpush1.msra.mxu0 0.0
        %1450 = vmatprep.subr.mxu0 0.0
        %1451 = vmatpush1.msra.mxu0 0.0
        %1452 = vmatprep.subr.mxu0 0.0
        %1453 = vmatpush1.msra.mxu0 0.0
        %1454 = vmatprep.subr.mxu0 0.0
        %1455 = vmatpush1.msra.mxu0 0.0
        %1456 = vmatprep.subr.mxu0 0.0
        %1457 = vmatpush1.msra.mxu0 0.0
        %1458 = vmatprep.subr.mxu0 0.0
        %1459 = vmatpush1.msra.mxu0 0.0
        %1460 = vmatprep.subr.mxu0 0.0
        %1461 = vmatpush1.msra.mxu0 0.0
        %1462 = vmatprep.subr.mxu0 0.0
        %1463 = vmatpush1.msra.mxu0 0.0
        %1464 = vmatprep.subr.mxu0 0.0
        %1465 = vmatpush1.msra.mxu0 0.0
        %1466 = vmatprep.subr.mxu0 %v1429
        %1467 = vmatpush1.msra.mxu0 %v1428
        %1468 = vmatprep.subr.mxu0 %v1425
        %1469 = vmatpush1.msra.mxu0 %v1424
        %1470 = vmatprep.subr.mxu0 %v1421
        %1471 = vmatpush1.msra.mxu0 %v1420
        %1472 = vmatprep.subr.mxu0 %v1417
        %1473 = vmatpush1.msra.mxu0 %v1416
        %1474 = vmatprep.subr.mxu0 0.0
        %1475 = vmatpush2.msra.mxu0 0.0
        %1476 = vmatprep.subr.mxu0 0.0
        %1477 = vmatpush2.msra.mxu0 0.0
        %1478 = vmatprep.subr.mxu0 0.0
        %1479 = vmatpush2.msra.mxu0 0.0
        %1480 = vmatprep.subr.mxu0 0.0
        %1481 = vmatpush2.msra.mxu0 0.0
        %1482 = vmatprep.subr.mxu0 0.0
        %1483 = vmatpush2.msra.mxu0 0.0
        %1484 = vmatprep.subr.mxu0 0.0
        %1485 = vmatpush2.msra.mxu0 0.0
        %1486 = vmatprep.subr.mxu0 0.0
        %1487 = vmatpush2.msra.mxu0 0.0
        %1488 = vmatprep.subr.mxu0 0.0
        %1489 = vmatpush2.msra.mxu0 0.0
        %1490 = vmatprep.subr.mxu0 0.0
        %1491 = vmatpush2.msra.mxu0 0.0
        %1492 = vmatprep.subr.mxu0 0.0
        %1493 = vmatpush2.msra.mxu0 0.0
        %1494 = vmatprep.subr.mxu0 0.0
        %1495 = vmatpush2.msra.mxu0 0.0
        %1496 = vmatprep.subr.mxu0 0.0
        %1497 = vmatpush2.msra.mxu0 0.0
        %1498 = vmatprep.subr.mxu0 0.0
        %1499 = vmatpush2.msra.mxu0 0.0
        %1500 = vmatprep.subr.mxu0 0.0
        %1501 = vmatpush2.msra.mxu0 0.0
        %1502 = vmatprep.subr.mxu0 0.0
        %1503 = vmatpush2.msra.mxu0 0.0
        %1504 = vmatprep.subr.mxu0 0.0
        %1505 = vmatpush2.msra.mxu0 0.0
        %1506 = vmatprep.mubr.f32.mxu0 0.0
        %1507 = vmatmul.mubr.f32.gmra.mxu0 %v1440
        %v1508 = vpop.f32.mrf.mxu0
        %v1509 = vadd.f32 %v1437, %v1508
        %v1510 = vpop.f32.mrf.mxu0
        %v1511 = vadd.f32 %v1437, %v1510
        %1512 = vdwg.mxu0
        %1513 = vmatprep.subr.mxu0 0.0
        %1514 = vmatpush1.msra.mxu0 0.0
        %1515 = vmatprep.subr.mxu0 0.0
        %1516 = vmatpush1.msra.mxu0 0.0
        %1517 = vmatprep.subr.mxu0 0.0
        %1518 = vmatpush1.msra.mxu0 0.0
        %1519 = vmatprep.subr.mxu0 0.0
        %1520 = vmatpush1.msra.mxu0 0.0
        %1521 = vmatprep.subr.mxu0 0.0
        %1522 = vmatpush1.msra.mxu0 0.0
        %1523 = vmatprep.subr.mxu0 0.0
        %1524 = vmatpush1.msra.mxu0 0.0
        %1525 = vmatprep.subr.mxu0 0.0
        %1526 = vmatpush1.msra.mxu0 0.0
        %1527 = vmatprep.subr.mxu0 0.0
        %1528 = vmatpush1.msra.mxu0 0.0
        %1529 = vmatprep.subr.mxu0 0.0
        %1530 = vmatpush1.msra.mxu0 0.0
        %1531 = vmatprep.subr.mxu0 0.0
        %1532 = vmatpush1.msra.mxu0 0.0
        %1533 = vmatprep.subr.mxu0 0.0
        %1534 = vmatpush1.msra.mxu0 0.0
        %1535 = vmatprep.subr.mxu0 0.0
        %1536 = vmatpush1.msra.mxu0 0.0
        %1537 = vmatprep.subr.mxu0 %v1431
        %1538 = vmatpush1.msra.mxu0 %v1430
        %1539 = vmatprep.subr.mxu0 %v1427
        %1540 = vmatpush1.msra.mxu0 %v1426
        %1541 = vmatprep.subr.mxu0 %v1423
        %1542 = vmatpush1.msra.mxu0 %v1422
        %1543 = vmatprep.subr.mxu0 %v1419
        %1544 = vmatpush1.msra.mxu0 %v1418
        %1545 = vmatprep.subr.mxu0 0.0
        %1546 = vmatpush2.msra.mxu0 0.0
        %1547 = vmatprep.subr.mxu0 0.0
        %1548 = vmatpush2.msra.mxu0 0.0
        %1549 = vmatprep.subr.mxu0 0.0
        %1550 = vmatpush2.msra.mxu0 0.0
        %1551 = vmatprep.subr.mxu0 0.0
        %1552 = vmatpush2.msra.mxu0 0.0
        %1553 = vmatprep.subr.mxu0 0.0
        %1554 = vmatpush2.msra.mxu0 0.0
        %1555 = vmatprep.subr.mxu0 0.0
        %1556 = vmatpush2.msra.mxu0 0.0
        %1557 = vmatprep.subr.mxu0 0.0
        %1558 = vmatpush2.msra.mxu0 0.0
        %1559 = vmatprep.subr.mxu0 0.0
        %1560 = vmatpush2.msra.mxu0 0.0
        %1561 = vmatprep.subr.mxu0 0.0
        %1562 = vmatpush2.msra.mxu0 0.0
        %1563 = vmatprep.subr.mxu0 0.0
        %1564 = vmatpush2.msra.mxu0 0.0
        %1565 = vmatprep.subr.mxu0 0.0
        %1566 = vmatpush2.msra.mxu0 0.0
        %1567 = vmatprep.subr.mxu0 0.0
        %1568 = vmatpush2.msra.mxu0 0.0
        %1569 = vmatprep.subr.mxu0 0.0
        %1570 = vmatpush2.msra.mxu0 0.0
        %1571 = vmatprep.subr.mxu0 0.0
        %1572 = vmatpush2.msra.mxu0 0.0
        %1573 = vmatprep.subr.mxu0 0.0
        %1574 = vmatpush2.msra.mxu0 0.0
        %1575 = vmatprep.subr.mxu0 0.0
        %1576 = vmatpush2.msra.mxu0 0.0
        %1577 = vmatprep.mubr.f32.mxu0 0.0
        %1578 = vmatmul.mubr.f32.gmra.mxu0 %v1440
        %v1579 = vpop.f32.mrf.mxu0
        %v1580 = vadd.f32 %v1437, %v1579
        %v1581 = vpop.f32.mrf.mxu0
        %v1582 = vadd.f32 %v1437, %v1581
        %1583 = vdwg.mxu0
        %v1584 = vlaneseq
        %v1585 = vshrl.u32 %v1584, 7
        %v1586 = vsub.s32 0, %v1585
        %v1587 = vrot.slane %v1509, %v1586
        %v1588 = vlaneseq
        %v1589 = vshrl.u32 %v1588, 7
        %v1590 = vsub.s32 0, %v1589
        %v1591 = vrot.slane %v1511, %v1590
        %v1592 = vlaneseq
        %v1593 = vshrl.u32 %v1592, 7
        %v1594 = vsub.s32 0, %v1593
        %v1595 = vrot.slane %v1580, %v1594
        %v1596 = vlaneseq
        %v1597 = vshrl.u32 %v1596, 7
        %v1598 = vsub.s32 0, %v1597
        %v1599 = vrot.slane %v1582, %v1598
        %v1600 = vmul.f32 %v863, %v1587
        %v1601 = vmul.f32 %v865, %v1591
        %v1602 = vmul.f32 %v940, %v1595
        %v1603 = vmul.f32 %v942, %v1599
        %v1604 = vlaneseq
        %v1605 = vshrl.u32 %v1604, 7
        %v1606 = vsub.s32 1, %v1605
        %v1607 = vrot.slane %v1509, %v1606
        %v1608 = vlaneseq
        %v1609 = vshrl.u32 %v1608, 7
        %v1610 = vsub.s32 1, %v1609
        %v1611 = vrot.slane %v1511, %v1610
        %v1612 = vlaneseq
        %v1613 = vshrl.u32 %v1612, 7
        %v1614 = vsub.s32 1, %v1613
        %v1615 = vrot.slane %v1580, %v1614
        %v1616 = vlaneseq
        %v1617 = vshrl.u32 %v1616, 7
        %v1618 = vsub.s32 1, %v1617
        %v1619 = vrot.slane %v1582, %v1618
        %v1620 = vmul.f32 %v863, %v1607
        %v1621 = vmul.f32 %v865, %v1611
        %v1622 = vmul.f32 %v940, %v1615
        %v1623 = vmul.f32 %v942, %v1619
        %v1628 = vrot.slane %v1620, 2
        %v1629 = vrot.slane %v1621, 2
        %v1630 = vrot.slane %v1622, 2
        %v1631 = vrot.slane %v1623, 2
        %v1636 = vadd.f32 %v1600, %v1628
        %v1637 = vadd.f32 %v1601, %v1629
        %v1638 = vadd.f32 %v1602, %v1630
        %v1639 = vadd.f32 %v1603, %v1631
        %v1640 = vlaneseq
        %v1641 = vshrl.u32 %v1640, 7
        %v1642 = vsub.s32 2, %v1641
        %v1643 = vrot.slane %v1509, %v1642
        %v1644 = vlaneseq
        %v1645 = vshrl.u32 %v1644, 7
        %v1646 = vsub.s32 2, %v1645
        %v1647 = vrot.slane %v1511, %v1646
        %v1648 = vlaneseq
        %v1649 = vshrl.u32 %v1648, 7
        %v1650 = vsub.s32 2, %v1649
        %v1651 = vrot.slane %v1580, %v1650
        %v1652 = vlaneseq
        %v1653 = vshrl.u32 %v1652, 7
        %v1654 = vsub.s32 2, %v1653
        %v1655 = vrot.slane %v1582, %v1654
        %v1656 = vmul.f32 %v863, %v1643
        %v1657 = vmul.f32 %v865, %v1647
        %v1658 = vmul.f32 %v940, %v1651
        %v1659 = vmul.f32 %v942, %v1655
        %v1664 = vrot.slane %v1656, 4
        %v1665 = vrot.slane %v1657, 4
        %v1666 = vrot.slane %v1658, 4
        %v1667 = vrot.slane %v1659, 4
        %v1672 = vadd.f32 %v1636, %v1664
        %v1673 = vadd.f32 %v1637, %v1665
        %v1674 = vadd.f32 %v1638, %v1666
        %v1675 = vadd.f32 %v1639, %v1667
        %v1676 = vlaneseq
        %v1677 = vshrl.u32 %v1676, 7
        %v1678 = vsub.s32 3, %v1677
        %v1679 = vrot.slane %v1509, %v1678
        %v1680 = vlaneseq
        %v1681 = vshrl.u32 %v1680, 7
        %v1682 = vsub.s32 3, %v1681
        %v1683 = vrot.slane %v1511, %v1682
        %v1684 = vlaneseq
        %v1685 = vshrl.u32 %v1684, 7
        %v1686 = vsub.s32 3, %v1685
        %v1687 = vrot.slane %v1580, %v1686
        %v1688 = vlaneseq
        %v1689 = vshrl.u32 %v1688, 7
        %v1690 = vsub.s32 3, %v1689
        %v1691 = vrot.slane %v1582, %v1690
        %v1692 = vmul.f32 %v863, %v1679
        %v1693 = vmul.f32 %v865, %v1683
        %v1694 = vmul.f32 %v940, %v1687
        %v1695 = vmul.f32 %v942, %v1691
        %v1700 = vrot.slane %v1692, 6
        %v1701 = vrot.slane %v1693, 6
        %v1702 = vrot.slane %v1694, 6
        %v1703 = vrot.slane %v1695, 6
        %v1708 = vadd.f32 %v1672, %v1700
        %v1709 = vadd.f32 %v1673, %v1701
        %v1710 = vadd.f32 %v1674, %v1702
        %v1711 = vadd.f32 %v1675, %v1703
        %v1712 = vlaneseq
        %v1713 = vshrl.u32 %v1712, 7
        %v1714 = vsub.s32 4, %v1713
        %v1715 = vrot.slane %v1509, %v1714
        %v1716 = vlaneseq
        %v1717 = vshrl.u32 %v1716, 7
        %v1718 = vsub.s32 4, %v1717
        %v1719 = vrot.slane %v1511, %v1718
        %v1720 = vlaneseq
        %v1721 = vshrl.u32 %v1720, 7
        %v1722 = vsub.s32 4, %v1721
        %v1723 = vrot.slane %v1580, %v1722
        %v1724 = vlaneseq
        %v1725 = vshrl.u32 %v1724, 7
        %v1726 = vsub.s32 4, %v1725
        %v1727 = vrot.slane %v1582, %v1726
        %v1728 = vmul.f32 %v869, %v1715
        %v1729 = vmul.f32 %v871, %v1719
        %v1730 = vmul.f32 %v946, %v1723
        %v1731 = vmul.f32 %v948, %v1727
        %v1732 = vadd.f32 %v1708, %v1728
        %v1733 = vadd.f32 %v1709, %v1729
        %v1734 = vadd.f32 %v1710, %v1730
        %v1735 = vadd.f32 %v1711, %v1731
        %v1736 = vlaneseq
        %v1737 = vshrl.u32 %v1736, 7
        %v1738 = vsub.s32 5, %v1737
        %v1739 = vrot.slane %v1509, %v1738
        %v1740 = vlaneseq
        %v1741 = vshrl.u32 %v1740, 7
        %v1742 = vsub.s32 5, %v1741
        %v1743 = vrot.slane %v1511, %v1742
        %v1744 = vlaneseq
        %v1745 = vshrl.u32 %v1744, 7
        %v1746 = vsub.s32 5, %v1745
        %v1747 = vrot.slane %v1580, %v1746
        %v1748 = vlaneseq
        %v1749 = vshrl.u32 %v1748, 7
        %v1750 = vsub.s32 5, %v1749
        %v1751 = vrot.slane %v1582, %v1750
        %v1752 = vmul.f32 %v869, %v1739
        %v1753 = vmul.f32 %v871, %v1743
        %v1754 = vmul.f32 %v946, %v1747
        %v1755 = vmul.f32 %v948, %v1751
        %v1760 = vrot.slane %v1752, 2
        %v1761 = vrot.slane %v1753, 2
        %v1762 = vrot.slane %v1754, 2
        %v1763 = vrot.slane %v1755, 2
        %v1768 = vadd.f32 %v1732, %v1760
        %v1769 = vadd.f32 %v1733, %v1761
        %v1770 = vadd.f32 %v1734, %v1762
        %v1771 = vadd.f32 %v1735, %v1763
        %v1772 = vlaneseq
        %v1773 = vshrl.u32 %v1772, 7
        %v1774 = vsub.s32 6, %v1773
        %v1775 = vrot.slane %v1509, %v1774
        %v1776 = vlaneseq
        %v1777 = vshrl.u32 %v1776, 7
        %v1778 = vsub.s32 6, %v1777
        %v1779 = vrot.slane %v1511, %v1778
        %v1780 = vlaneseq
        %v1781 = vshrl.u32 %v1780, 7
        %v1782 = vsub.s32 6, %v1781
        %v1783 = vrot.slane %v1580, %v1782
        %v1784 = vlaneseq
        %v1785 = vshrl.u32 %v1784, 7
        %v1786 = vsub.s32 6, %v1785
        %v1787 = vrot.slane %v1582, %v1786
        %v1788 = vmul.f32 %v869, %v1775
        %v1789 = vmul.f32 %v871, %v1779
        %v1790 = vmul.f32 %v946, %v1783
        %v1791 = vmul.f32 %v948, %v1787
        %v1796 = vrot.slane %v1788, 4
        %v1797 = vrot.slane %v1789, 4
        %v1798 = vrot.slane %v1790, 4
        %v1799 = vrot.slane %v1791, 4
        %v1804 = vadd.f32 %v1768, %v1796
        %v1805 = vadd.f32 %v1769, %v1797
        %v1806 = vadd.f32 %v1770, %v1798
        %v1807 = vadd.f32 %v1771, %v1799
        %v1808 = vlaneseq
        %v1809 = vshrl.u32 %v1808, 7
        %v1810 = vsub.s32 7, %v1809
        %v1811 = vrot.slane %v1509, %v1810
        %v1812 = vlaneseq
        %v1813 = vshrl.u32 %v1812, 7
        %v1814 = vsub.s32 7, %v1813
        %v1815 = vrot.slane %v1511, %v1814
        %v1816 = vlaneseq
        %v1817 = vshrl.u32 %v1816, 7
        %v1818 = vsub.s32 7, %v1817
        %v1819 = vrot.slane %v1580, %v1818
        %v1820 = vlaneseq
        %v1821 = vshrl.u32 %v1820, 7
        %v1822 = vsub.s32 7, %v1821
        %v1823 = vrot.slane %v1582, %v1822
        %v1824 = vmul.f32 %v869, %v1811
        %v1825 = vmul.f32 %v871, %v1815
        %v1826 = vmul.f32 %v946, %v1819
        %v1827 = vmul.f32 %v948, %v1823
        %v1832 = vrot.slane %v1824, 6
        %v1833 = vrot.slane %v1825, 6
        %v1834 = vrot.slane %v1826, 6
        %v1835 = vrot.slane %v1827, 6
        %v1840 = vadd.f32 %v1804, %v1832
        %v1841 = vadd.f32 %v1805, %v1833
        %v1842 = vadd.f32 %v1806, %v1834
        %v1843 = vadd.f32 %v1807, %v1835
        %s1844 = sld [smem:[#allocation2]]
        %v1845 = vstv %s1844
        %v1846 = vadd.f32 %v1840, %v1845
        %v1847 = vadd.f32 %v1841, %v1845
        %v1848 = vadd.f32 %v1842, %v1845
        %v1849 = vadd.f32 %v1843, %v1845
        %v1854 = vcombine.low %v1846, %v1847
        %v1855 = vcombine.low %v1848, %v1849
        %v1857 = vunpack.c.l.s4 1983009808
        %v1858 = vunpack.c.0.s8 %v1857
        %v1859 = vlaneseq
        %v1860 = vshrl.u32 %v1859, 7
        %v1861 = vsub.s32 %v1858, %v1860
        %v1862 = vrot.slane %v1854, %v1861
        %v1864 = vunpack.c.l.s4 1983009808
        %v1865 = vunpack.c.0.s8 %v1864
        %v1866 = vlaneseq
        %v1867 = vshrl.u32 %v1866, 7
        %v1868 = vsub.s32 %v1865, %v1867
        %v1869 = vrot.slane %v1855, %v1868
        %v1870 = vcombine.low %v1862, %v1869
        %1872 = vst [vmem:[%s269] sm:$0xff] %v1870
        %s1873 = sand.u32 %s161, 1
        %s1874 = scalar_lea.sflag [#allocation4], %s1873
        %s1875 = sand.u32 %s161, 1
        %s1876 = smul.addr %s1875, 8
        %s1877 = scalar_lea.vmem [#allocation3], %s1876
        // Predicated region
        $region41: #{tpu_custom_call.1} parent=39 // pred_check
          %p1878 = pneg %p171
        $region42: #{tpu_custom_call.1} parent=39 // pred_check_branch
          %1880 = sbr.rel (%p1878) target = $region44
        $region43: #{tpu_custom_call.1} parent=39 // pred_region
          %s1881 = smul.u32 4, %s25
          %s1883 = ssub.s32 128, 128
          %1884 = vsyncadd %s1874, %s1883
          %s1885 = smul.addr %s24, 4
          %s1886 = sadd.s32 %s1881, %s1885
          %s1887 = smul.addr %s1886, 32
          %s1888 = scalar_lea.hbm %s5, %s1887
          %s1890 = sshll.u32 %s1877, 4
          %s1891 = int_to_ptr.vmem [resolvable:$true] %s1890
          %1893 = dma.vmem_to_hbm [thread:$0]  %s1891, 128, %s1888, %s1874
        $region44: #{tpu_custom_call.1} parent=39 // pred_fallthru
          _
      $region40: #{tpu_custom_call.1} parent=5 // pred_fallthru
        _
      %p1894 = scmp.le.s32.totalorder 2, %s15
      // Predicated region
      $region45: #{tpu_custom_call.1} parent=5 // pred_check
        %p1895 = pneg %p1894
      $region46: #{tpu_custom_call.1} parent=5 // pred_check_branch
        %1897 = sbr.rel (%p1895) target = $region48
      $region47: #{tpu_custom_call.1} parent=5 // pred_region
        %s1898 = ssub.s32 %s15, 2
        // Predicated region
        $region49: #{tpu_custom_call.1} parent=47 // pred_check
          %p1899 = pneg %p177
        $region50: #{tpu_custom_call.1} parent=47 // pred_check_branch
          %1901 = sbr.rel (%p1899) target = $region52
        $region51: #{tpu_custom_call.1} parent=47 // pred_region
          %s1902 = sand.u32 %s162, 1
          %s1903 = scalar_lea.sflag [#allocation4], %s1902
          %s1904 = sand.u32 %s162, 1
          %s1905 = smul.addr %s1904, 8
          %s1906 = scalar_lea.vmem [#allocation3], %s1905
          %1907 = dma.done %s1903, 128
        $region52: #{tpu_custom_call.1} parent=47 // pred_fallthru
          _
      $region48: #{tpu_custom_call.1} parent=5 // pred_fallthru
        _
    $region6: #{tpu_custom_call.1} parent=1 // loop_footer
      %s19 = sadd.s32 1, %s15
    $region7: #{tpu_custom_call.1} parent=1 // loop_footer_branch
      %14 = sbr.rel target = $region3
    $region8: #{tpu_custom_call.1} parent=1 // loop_exit
      _
    %1908 = vsyncpa [#allocation4], 1
    %s1909 = scalar_lea.sflag [#allocation4], 1
    %1910 = vsyncpa %s1909, 1

</llo_original>
